<compile_context>
chip_gen: v7x
topology: tpu7x:2x2x1
jax: 0.10.0
libtpu: 0.0.40
codegen_flags: <defaults>
</compile_context>

<pallas_src>
import numpy as np
import jax
import jax.numpy as jnp
from jax import lax
from jax.experimental import pallas as pl
from jax.experimental.pallas import tpu as pltpu  # noqa: F401

_LANES = 128


def _round_up(x, m):
    return (x + m - 1) // m * m


def _make_fused_encoder_kernel(cfgs, eps, mm_dtype):
    """Fused kernel body. Ref layout:
       (x_ref, [w_i, T_i, gamma_i, beta_i] * num_layers, out_ref)."""
    num_layers = len(cfgs)

    def kernel(*refs):
        x_ref = refs[0]
        out_ref = refs[-1]
        src = x_ref[...]                                   # (M_in0, c_in_pad0), mm_dtype
        for i, cfg in enumerate(cfgs):
            w_all = refs[1 + 4 * i][...]                   # (K, c_in_pad, 128)  mm_dtype
            t_all = refs[2 + 4 * i][...]                   # (K, M_out, M_in)    f32
            gamma = refs[3 + 4 * i][...]                   # (1, 128)            f32
            beta = refs[4 + 4 * i][...]                    # (1, 128)            f32

            c_in_pad = cfg["c_in_pad"]
            m_out = cfg["m_out"]

            # One lane-prefix slice + one cast per layer (not per tap).
            src_in = src[:, :c_in_pad].astype(mm_dtype)    # (M_in, c_in_pad)

            # Conv as K tap matmuls, whole batch folded into the M dim; T_k encodes the
            # zero-padding halo and the stride (pure row selection, exact in f32).
            acc = jnp.zeros((m_out, _LANES), jnp.float32)
            for k in range(cfg["k"]):
                z = jnp.dot(src_in, w_all[k], preferred_element_type=jnp.float32)
                acc = acc + jnp.dot(t_all[k], z, preferred_element_type=jnp.float32)

            # BatchNorm1d training statistics over the N*L_out rows, per channel (lane).
            inv_cnt = 1.0 / float(m_out)
            mean = jnp.sum(acc, axis=0, keepdims=True) * inv_cnt
            var = jnp.maximum(jnp.sum(acc * acc, axis=0, keepdims=True) * inv_cnt
                              - mean * mean, 0.0)
            scale = gamma * lax.rsqrt(var + eps)           # zero in padded channels
            shift = beta - mean * scale
            y = jnp.maximum(acc * scale + shift, 0.0)      # (M_out, 128) f32

            if i == num_layers - 1:
                out_ref[...] = y.astype(out_ref.dtype)     # full lane-dense store
            else:
                src = y                                    # stays resident, no HBM round-trip

    return kernel


def joint_vae_encoder_forward(x, params, ks, ss, ps, *, eps=1e-5, mm_dtype=jnp.bfloat16):
    """Fused forward of joint_vae_encoder.  x: (N, C_in, L) float32 (NCL like PyTorch).
    params[i] = (w, b, gamma, beta) with PyTorch shapes w:(C_out,C_in,K), b/gamma/beta:(C_out,).
    Conv bias b is ignored (cancels exactly under training-mode BatchNorm)."""
    n_batch, c_in0, l_in = x.shape
    num_layers = len(params)
    assert num_layers == len(ks) == len(ss) == len(ps)
    sub = 8 if jnp.dtype(mm_dtype) == jnp.dtype(jnp.float32) else 16

    cfgs, flat_inputs = [], []
    l_cur, c_cur = l_in, c_in0
    for (w, b, gamma, beta), k, s, p in zip(params, ks, ss, ps):
        c_out = w.shape[0]
        assert w.shape == (c_out, c_cur, k) and c_out <= _LANES
        l_out = (l_cur + 2 * p - k) // s + 1
        assert l_out >= 1
        c_in_pad = _round_up(c_cur, sub)
        m_in, m_out = n_batch * l_cur, n_batch * l_out
        cfgs.append(dict(k=k, c_in_pad=c_in_pad, m_out=m_out))

        # Weights: (C_out, C_in, K) -> per-tap (C_in, C_out), padded to (K, c_in_pad, 128).
        w_t = np.transpose(np.asarray(w, np.float32), (2, 1, 0))
        w_pad = np.zeros((k, c_in_pad, _LANES), np.float32)
        w_pad[:, :c_cur, :c_out] = w_t

        # Per-tap 0/1 selection matrices (block-diagonal per sample): row n*l_out+so selects
        # input row so*s + k - p of sample n; out-of-range rows stay zero (= conv zero padding).
        t_sel = np.zeros((k, m_out, m_in), np.float32)
        for kk in range(k):
            for n in range(n_batch):
                for so in range(l_out):
                    j = so * s + kk - p
                    if 0 <= j < l_cur:
                        t_sel[kk, n * l_out + so, n * l_cur + j] = 1.0

        g_pad = np.zeros((1, _LANES), np.float32)
        g_pad[0, :c_out] = np.asarray(gamma, np.float32)
        b_pad = np.zeros((1, _LANES), np.float32)
        b_pad[0, :c_out] = np.asarray(beta, np.float32)

        flat_inputs += [jnp.asarray(w_pad, mm_dtype), jnp.asarray(t_sel),
                        jnp.asarray(g_pad), jnp.asarray(b_pad)]
        l_cur, c_cur = l_out, c_out

    # Entry layout plumbing (once): NCL -> (N*L, c_in_pad0), channel-zero-padded, mm_dtype.
    c_in_pad0 = cfgs[0]["c_in_pad"]
    x_flat = jnp.transpose(x, (0, 2, 1)).reshape(n_batch * l_in, c_in0)
    x_flat = jnp.pad(x_flat, ((0, 0), (0, c_in_pad0 - c_in0))).astype(mm_dtype)

    kernel = _make_fused_encoder_kernel(cfgs, eps, mm_dtype)
    out_flat = pl.pallas_call(
        kernel,
        out_shape=jax.ShapeDtypeStruct((n_batch * l_cur, _LANES), jnp.float32),
    )(x_flat, *flat_inputs)

    # Exit layout plumbing: drop padded channels, back to NCL.
    out = out_flat.reshape(n_batch, l_cur, _LANES)[:, :, :c_cur]
    return jnp.transpose(out, (0, 2, 1))


# ---------------- pure-JAX reference (for correctness check) -----------------
def _ref_layer(x, w, b, gamma, beta, *, stride, padding, eps=1e-5):
    y = lax.conv_general_dilated(
        x, w, window_strides=(stride,), padding=[(padding, padding)],
        dimension_numbers=("NCH", "OIH", "NCH"))
    y = y + b[None, :, None]
    mean = jnp.mean(y, axis=(0, 2), keepdims=True)
    var = jnp.mean((y - mean) ** 2, axis=(0, 2), keepdims=True)
    y = (y - mean) * lax.rsqrt(var + eps)
    y = gamma[None, :, None] * y + beta[None, :, None]
    return jnp.maximum(y, 0.0)


def _ref_forward(x, params, ss, ps):
    for (w, b, gamma, beta), s, p in zip(params, ss, ps):
        x = _ref_layer(x, w, b, gamma, beta, stride=s, padding=p)
    return x


if __name__ == "__main__":
    # Module config: joint_vae_encoder(ch_in=4, hids=[8,16], ks=[3,3], ss=[1,2], ps=[1,1])
    N, ch_in, L = 2, 4, 16
    hids = [8, 16]
    ks = [3, 3]
    ss = [1, 2]
    ps = [1, 1]

    key = jax.random.PRNGKey(0)
    key, xk = jax.random.split(key)
    x = jax.random.normal(xk, (N, ch_in, L), dtype=jnp.float32)

    # Deterministic parameter init (Conv1d + BatchNorm1d shapes/defaults).
    params = []
    c_in = ch_in
    for h, k in zip(hids, ks):
        key, wk, bk = jax.random.split(key, 3)
        scale = 1.0 / jnp.sqrt(jnp.float32(c_in * k))
        w = jax.random.uniform(wk, (h, c_in, k), jnp.float32, -scale, scale)
        b = jax.random.uniform(bk, (h,), jnp.float32, -scale, scale)
        gamma = jnp.ones((h,), jnp.float32)   # BatchNorm1d default weight
        beta = jnp.zeros((h,), jnp.float32)   # BatchNorm1d default bias
        params.append((w, b, gamma, beta))
        c_in = h

    ref = jax.block_until_ready(_ref_forward(x, params, ss, ps))

    # Expected spatial length after the conv stack.
    l_exp = L
    for k, s, p in zip(ks, ss, ps):
        l_exp = (l_exp + 2 * p - k) // s + 1

    # 1) f32 MXU path: tight check against the reference.
    out_f32 = jax.block_until_ready(
        joint_vae_encoder_forward(x, params, ks, ss, ps, mm_dtype=jnp.float32))
    assert out_f32.shape == ref.shape == (N, hids[-1], l_exp), (out_f32.shape, ref.shape)
    err32 = float(jnp.max(jnp.abs(out_f32 - ref)))
    assert jnp.allclose(out_f32, ref, rtol=1e-3, atol=1e-3), f"f32 mismatch, max abs err={err32}"

    # 2) Default bf16 MXU path (perf default): looser tolerance for bf16 matmul inputs.
    out_bf16 = jax.block_until_ready(joint_vae_encoder_forward(x, params, ks, ss, ps))
    assert out_bf16.shape == ref.shape
    errbf = float(jnp.max(jnp.abs(out_bf16 - ref)))
    assert jnp.allclose(out_bf16, ref, rtol=1e-1, atol=1e-1), f"bf16 mismatch, max abs err={errbf}"

    print("KERNEL_OK")
</pallas_src>

<mosaic_0001>
module attributes {stable_mosaic.version = 11 : i64} {
  func.func @kernel(%arg0: memref<32x8xf32, #tpu.memory_space<vmem>>, %arg1: memref<3x8x128xf32, #tpu.memory_space<vmem>>, %arg2: memref<3x32x32xf32, #tpu.memory_space<vmem>>, %arg3: memref<1x128xf32, #tpu.memory_space<vmem>>, %arg4: memref<1x128xf32, #tpu.memory_space<vmem>>, %arg5: memref<3x8x128xf32, #tpu.memory_space<vmem>>, %arg6: memref<3x16x32xf32, #tpu.memory_space<vmem>>, %arg7: memref<1x128xf32, #tpu.memory_space<vmem>>, %arg8: memref<1x128xf32, #tpu.memory_space<vmem>>, %arg9: memref<16x128xf32, #tpu.memory_space<vmem>>) attributes {dimension_semantics = [], scalar_prefetch = 0 : i64, scratch_operands = 0 : i64, tpu.core_type = #tpu.core_type<tc>} {
    %c0 = arith.constant 0 : index
    %c0_0 = arith.constant 0 : index
    %0 = vector.load %arg0[%c0, %c0_0] : memref<32x8xf32, #tpu.memory_space<vmem>>, vector<32x8xf32>
    %c0_1 = arith.constant 0 : index
    %c0_2 = arith.constant 0 : index
    %c0_3 = arith.constant 0 : index
    %1 = vector.load %arg1[%c0_1, %c0_2, %c0_3] : memref<3x8x128xf32, #tpu.memory_space<vmem>>, vector<3x8x128xf32>
    %c0_4 = arith.constant 0 : index
    %c0_5 = arith.constant 0 : index
    %c0_6 = arith.constant 0 : index
    %2 = vector.load %arg2[%c0_4, %c0_5, %c0_6] : memref<3x32x32xf32, #tpu.memory_space<vmem>>, vector<3x32x32xf32>
    %c0_7 = arith.constant 0 : index
    %c0_8 = arith.constant 0 : index
    %3 = vector.load %arg3[%c0_7, %c0_8] : memref<1x128xf32, #tpu.memory_space<vmem>>, vector<1x128xf32>
    %c0_9 = arith.constant 0 : index
    %c0_10 = arith.constant 0 : index
    %4 = vector.load %arg4[%c0_9, %c0_10] : memref<1x128xf32, #tpu.memory_space<vmem>>, vector<1x128xf32>
    %cst = arith.constant 0.000000e+00 : f32
    %5 = vector.broadcast %cst : f32 to vector<32x128xf32>
    %6 = vector.extract_strided_slice %1 {offsets = [0, 0, 0], sizes = [1, 8, 128], strides = [1, 1, 1]} : vector<3x8x128xf32> to vector<1x8x128xf32>
    %7 = vector.shape_cast %6 : vector<1x8x128xf32> to vector<8x128xf32>
    %cst_11 = arith.constant dense<0.000000e+00> : vector<32x128xf32>
    %8 = tpu.matmul %0, %7, %cst_11 {dimension_numbers = #tpu.dot_dimension_numbers<[1], [0], [0], [1], [0, 0, 1, 1], [], []>} : vector<32x8xf32>, vector<8x128xf32>, vector<32x128xf32> -> vector<32x128xf32>
    %9 = vector.extract_strided_slice %2 {offsets = [0, 0, 0], sizes = [1, 32, 32], strides = [1, 1, 1]} : vector<3x32x32xf32> to vector<1x32x32xf32>
    %10 = vector.shape_cast %9 : vector<1x32x32xf32> to vector<32x32xf32>
    %cst_12 = arith.constant dense<0.000000e+00> : vector<32x128xf32>
    %11 = tpu.matmul %10, %8, %cst_12 {dimension_numbers = #tpu.dot_dimension_numbers<[1], [0], [0], [1], [0, 0, 1, 1], [], []>} : vector<32x32xf32>, vector<32x128xf32>, vector<32x128xf32> -> vector<32x128xf32>
    %12 = arith.addf %5, %11 : vector<32x128xf32>
    %13 = vector.extract_strided_slice %1 {offsets = [1, 0, 0], sizes = [1, 8, 128], strides = [1, 1, 1]} : vector<3x8x128xf32> to vector<1x8x128xf32>
    %14 = vector.shape_cast %13 : vector<1x8x128xf32> to vector<8x128xf32>
    %cst_13 = arith.constant dense<0.000000e+00> : vector<32x128xf32>
    %15 = tpu.matmul %0, %14, %cst_13 {dimension_numbers = #tpu.dot_dimension_numbers<[1], [0], [0], [1], [0, 0, 1, 1], [], []>} : vector<32x8xf32>, vector<8x128xf32>, vector<32x128xf32> -> vector<32x128xf32>
    %16 = vector.extract_strided_slice %2 {offsets = [1, 0, 0], sizes = [1, 32, 32], strides = [1, 1, 1]} : vector<3x32x32xf32> to vector<1x32x32xf32>
    %17 = vector.shape_cast %16 : vector<1x32x32xf32> to vector<32x32xf32>
    %cst_14 = arith.constant dense<0.000000e+00> : vector<32x128xf32>
    %18 = tpu.matmul %17, %15, %cst_14 {dimension_numbers = #tpu.dot_dimension_numbers<[1], [0], [0], [1], [0, 0, 1, 1], [], []>} : vector<32x32xf32>, vector<32x128xf32>, vector<32x128xf32> -> vector<32x128xf32>
    %19 = arith.addf %12, %18 : vector<32x128xf32>
    %20 = vector.extract_strided_slice %1 {offsets = [2, 0, 0], sizes = [1, 8, 128], strides = [1, 1, 1]} : vector<3x8x128xf32> to vector<1x8x128xf32>
    %21 = vector.shape_cast %20 : vector<1x8x128xf32> to vector<8x128xf32>
    %cst_15 = arith.constant dense<0.000000e+00> : vector<32x128xf32>
    %22 = tpu.matmul %0, %21, %cst_15 {dimension_numbers = #tpu.dot_dimension_numbers<[1], [0], [0], [1], [0, 0, 1, 1], [], []>} : vector<32x8xf32>, vector<8x128xf32>, vector<32x128xf32> -> vector<32x128xf32>
    %23 = vector.extract_strided_slice %2 {offsets = [2, 0, 0], sizes = [1, 32, 32], strides = [1, 1, 1]} : vector<3x32x32xf32> to vector<1x32x32xf32>
    %24 = vector.shape_cast %23 : vector<1x32x32xf32> to vector<32x32xf32>
    %cst_16 = arith.constant dense<0.000000e+00> : vector<32x128xf32>
    %25 = tpu.matmul %24, %22, %cst_16 {dimension_numbers = #tpu.dot_dimension_numbers<[1], [0], [0], [1], [0, 0, 1, 1], [], []>} : vector<32x32xf32>, vector<32x128xf32>, vector<32x128xf32> -> vector<32x128xf32>
    %26 = arith.addf %19, %25 : vector<32x128xf32>
    %cst_17 = arith.constant dense<0.000000e+00> : vector<128xf32>
    %27 = vector.multi_reduction <add>, %26, %cst_17 [0] : vector<32x128xf32> to vector<128xf32>
    %28 = vector.shape_cast %27 : vector<128xf32> to vector<1x128xf32>
    %cst_18 = arith.constant 3.125000e-02 : f32
    %29 = vector.broadcast %cst_18 : f32 to vector<1x128xf32>
    %30 = arith.mulf %28, %29 : vector<1x128xf32>
    %31 = arith.mulf %26, %26 : vector<32x128xf32>
    %cst_19 = arith.constant dense<0.000000e+00> : vector<128xf32>
    %32 = vector.multi_reduction <add>, %31, %cst_19 [0] : vector<32x128xf32> to vector<128xf32>
    %33 = vector.shape_cast %32 : vector<128xf32> to vector<1x128xf32>
    %cst_20 = arith.constant 3.125000e-02 : f32
    %34 = vector.broadcast %cst_20 : f32 to vector<1x128xf32>
    %35 = arith.mulf %33, %34 : vector<1x128xf32>
    %36 = arith.mulf %30, %30 : vector<1x128xf32>
    %37 = arith.subf %35, %36 : vector<1x128xf32>
    %cst_21 = arith.constant 0.000000e+00 : f32
    %38 = vector.broadcast %cst_21 : f32 to vector<1x128xf32>
    %39 = arith.maximumf %37, %38 : vector<1x128xf32>
    %cst_22 = arith.constant 9.99999974E-6 : f32
    %40 = vector.broadcast %cst_22 : f32 to vector<1x128xf32>
    %41 = arith.addf %39, %40 : vector<1x128xf32>
    %42 = math.rsqrt %41 : vector<1x128xf32>
    %43 = arith.mulf %3, %42 : vector<1x128xf32>
    %44 = arith.mulf %30, %43 : vector<1x128xf32>
    %45 = arith.subf %4, %44 : vector<1x128xf32>
    %46 = vector.broadcast %43 : vector<1x128xf32> to vector<32x128xf32>
    %47 = arith.mulf %26, %46 : vector<32x128xf32>
    %48 = vector.broadcast %45 : vector<1x128xf32> to vector<32x128xf32>
    %49 = arith.addf %47, %48 : vector<32x128xf32>
    %cst_23 = arith.constant 0.000000e+00 : f32
    %50 = vector.broadcast %cst_23 : f32 to vector<32x128xf32>
    %51 = arith.maximumf %49, %50 : vector<32x128xf32>
    %c0_24 = arith.constant 0 : index
    %c0_25 = arith.constant 0 : index
    %c0_26 = arith.constant 0 : index
    %52 = vector.load %arg5[%c0_24, %c0_25, %c0_26] : memref<3x8x128xf32, #tpu.memory_space<vmem>>, vector<3x8x128xf32>
    %c0_27 = arith.constant 0 : index
    %c0_28 = arith.constant 0 : index
    %c0_29 = arith.constant 0 : index
    %53 = vector.load %arg6[%c0_27, %c0_28, %c0_29] : memref<3x16x32xf32, #tpu.memory_space<vmem>>, vector<3x16x32xf32>
    %c0_30 = arith.constant 0 : index
    %c0_31 = arith.constant 0 : index
    %54 = vector.load %arg7[%c0_30, %c0_31] : memref<1x128xf32, #tpu.memory_space<vmem>>, vector<1x128xf32>
    %c0_32 = arith.constant 0 : index
    %c0_33 = arith.constant 0 : index
    %55 = vector.load %arg8[%c0_32, %c0_33] : memref<1x128xf32, #tpu.memory_space<vmem>>, vector<1x128xf32>
    %56 = vector.extract_strided_slice %51 {offsets = [0, 0], sizes = [32, 8], strides = [1, 1]} : vector<32x128xf32> to vector<32x8xf32>
    %cst_34 = arith.constant 0.000000e+00 : f32
    %57 = vector.broadcast %cst_34 : f32 to vector<16x128xf32>
    %58 = vector.extract_strided_slice %52 {offsets = [0, 0, 0], sizes = [1, 8, 128], strides = [1, 1, 1]} : vector<3x8x128xf32> to vector<1x8x128xf32>
    %59 = vector.shape_cast %58 : vector<1x8x128xf32> to vector<8x128xf32>
    %cst_35 = arith.constant dense<0.000000e+00> : vector<32x128xf32>
    %60 = tpu.matmul %56, %59, %cst_35 {dimension_numbers = #tpu.dot_dimension_numbers<[1], [0], [0], [1], [0, 0, 1, 1], [], []>} : vector<32x8xf32>, vector<8x128xf32>, vector<32x128xf32> -> vector<32x128xf32>
    %61 = vector.extract_strided_slice %53 {offsets = [0, 0, 0], sizes = [1, 16, 32], strides = [1, 1, 1]} : vector<3x16x32xf32> to vector<1x16x32xf32>
    %62 = vector.shape_cast %61 : vector<1x16x32xf32> to vector<16x32xf32>
    %cst_36 = arith.constant dense<0.000000e+00> : vector<16x128xf32>
    %63 = tpu.matmul %62, %60, %cst_36 {dimension_numbers = #tpu.dot_dimension_numbers<[1], [0], [0], [1], [0, 0, 1, 1], [], []>} : vector<16x32xf32>, vector<32x128xf32>, vector<16x128xf32> -> vector<16x128xf32>
    %64 = arith.addf %57, %63 : vector<16x128xf32>
    %65 = vector.extract_strided_slice %52 {offsets = [1, 0, 0], sizes = [1, 8, 128], strides = [1, 1, 1]} : vector<3x8x128xf32> to vector<1x8x128xf32>
    %66 = vector.shape_cast %65 : vector<1x8x128xf32> to vector<8x128xf32>
    %cst_37 = arith.constant dense<0.000000e+00> : vector<32x128xf32>
    %67 = tpu.matmul %56, %66, %cst_37 {dimension_numbers = #tpu.dot_dimension_numbers<[1], [0], [0], [1], [0, 0, 1, 1], [], []>} : vector<32x8xf32>, vector<8x128xf32>, vector<32x128xf32> -> vector<32x128xf32>
    %68 = vector.extract_strided_slice %53 {offsets = [1, 0, 0], sizes = [1, 16, 32], strides = [1, 1, 1]} : vector<3x16x32xf32> to vector<1x16x32xf32>
    %69 = vector.shape_cast %68 : vector<1x16x32xf32> to vector<16x32xf32>
    %cst_38 = arith.constant dense<0.000000e+00> : vector<16x128xf32>
    %70 = tpu.matmul %69, %67, %cst_38 {dimension_numbers = #tpu.dot_dimension_numbers<[1], [0], [0], [1], [0, 0, 1, 1], [], []>} : vector<16x32xf32>, vector<32x128xf32>, vector<16x128xf32> -> vector<16x128xf32>
    %71 = arith.addf %64, %70 : vector<16x128xf32>
    %72 = vector.extract_strided_slice %52 {offsets = [2, 0, 0], sizes = [1, 8, 128], strides = [1, 1, 1]} : vector<3x8x128xf32> to vector<1x8x128xf32>
    %73 = vector.shape_cast %72 : vector<1x8x128xf32> to vector<8x128xf32>
    %cst_39 = arith.constant dense<0.000000e+00> : vector<32x128xf32>
    %74 = tpu.matmul %56, %73, %cst_39 {dimension_numbers = #tpu.dot_dimension_numbers<[1], [0], [0], [1], [0, 0, 1, 1], [], []>} : vector<32x8xf32>, vector<8x128xf32>, vector<32x128xf32> -> vector<32x128xf32>
    %75 = vector.extract_strided_slice %53 {offsets = [2, 0, 0], sizes = [1, 16, 32], strides = [1, 1, 1]} : vector<3x16x32xf32> to vector<1x16x32xf32>
    %76 = vector.shape_cast %75 : vector<1x16x32xf32> to vector<16x32xf32>
    %cst_40 = arith.constant dense<0.000000e+00> : vector<16x128xf32>
    %77 = tpu.matmul %76, %74, %cst_40 {dimension_numbers = #tpu.dot_dimension_numbers<[1], [0], [0], [1], [0, 0, 1, 1], [], []>} : vector<16x32xf32>, vector<32x128xf32>, vector<16x128xf32> -> vector<16x128xf32>
    %78 = arith.addf %71, %77 : vector<16x128xf32>
    %cst_41 = arith.constant dense<0.000000e+00> : vector<128xf32>
    %79 = vector.multi_reduction <add>, %78, %cst_41 [0] : vector<16x128xf32> to vector<128xf32>
    %80 = vector.shape_cast %79 : vector<128xf32> to vector<1x128xf32>
    %cst_42 = arith.constant 6.250000e-02 : f32
    %81 = vector.broadcast %cst_42 : f32 to vector<1x128xf32>
    %82 = arith.mulf %80, %81 : vector<1x128xf32>
    %83 = arith.mulf %78, %78 : vector<16x128xf32>
    %cst_43 = arith.constant dense<0.000000e+00> : vector<128xf32>
    %84 = vector.multi_reduction <add>, %83, %cst_43 [0] : vector<16x128xf32> to vector<128xf32>
    %85 = vector.shape_cast %84 : vector<128xf32> to vector<1x128xf32>
    %cst_44 = arith.constant 6.250000e-02 : f32
    %86 = vector.broadcast %cst_44 : f32 to vector<1x128xf32>
    %87 = arith.mulf %85, %86 : vector<1x128xf32>
    %88 = arith.mulf %82, %82 : vector<1x128xf32>
    %89 = arith.subf %87, %88 : vector<1x128xf32>
    %cst_45 = arith.constant 0.000000e+00 : f32
    %90 = vector.broadcast %cst_45 : f32 to vector<1x128xf32>
    %91 = arith.maximumf %89, %90 : vector<1x128xf32>
    %cst_46 = arith.constant 9.99999974E-6 : f32
    %92 = vector.broadcast %cst_46 : f32 to vector<1x128xf32>
    %93 = arith.addf %91, %92 : vector<1x128xf32>
    %94 = math.rsqrt %93 : vector<1x128xf32>
    %95 = arith.mulf %54, %94 : vector<1x128xf32>
    %96 = arith.mulf %82, %95 : vector<1x128xf32>
    %97 = arith.subf %55, %96 : vector<1x128xf32>
    %98 = vector.broadcast %95 : vector<1x128xf32> to vector<16x128xf32>
    %99 = arith.mulf %78, %98 : vector<16x128xf32>
    %100 = vector.broadcast %97 : vector<1x128xf32> to vector<16x128xf32>
    %101 = arith.addf %99, %100 : vector<16x128xf32>
    %cst_47 = arith.constant 0.000000e+00 : f32
    %102 = vector.broadcast %cst_47 : f32 to vector<16x128xf32>
    %103 = arith.maximumf %101, %102 : vector<16x128xf32>
    %c0_48 = arith.constant 0 : index
    %c0_49 = arith.constant 0 : index
    %104 = vector.load %arg9[%c0_48, %c0_49] : memref<16x128xf32, #tpu.memory_space<vmem>>, vector<16x128xf32>
    tpu.vector_store %arg9[%c0_48, %c0_49], %103 {strides = array<i32>} : memref<16x128xf32, #tpu.memory_space<vmem>>, vector<16x128xf32>,
    return
  }
}

</mosaic_0001>

<llo_original>
// kernel: tpu_custom_call.1
$region0: #{tpu_custom_call.1}
  #allocation0 [shape = 'u32[]', space=smem, size = 0x4, offset = 0x4, fixed_abs, tag = 'smem constant byte address 0x4 - core index']
  #allocation1 [shape = 'u32[144,128]{1,0:T(1,128)}', space=vmem, size = 0x12000, scoped, tag = 'internal scratch']
  %s0 = inlined_call_operand.vmem [shape: f32[32,8], index: 0, kind: input, shape index: {}]
  %s1 = inlined_call_operand.hbm [shape: f32[3,8,128], index: 1, kind: input, shape index: {}]
  %s2 = inlined_call_operand.hbm [shape: f32[3,32,32], index: 2, kind: input, shape index: {}]
  %s3 = inlined_call_operand.vmem [shape: f32[1,128], index: 3, kind: input, shape index: {}]
  %s4 = inlined_call_operand.vmem [shape: f32[1,128], index: 4, kind: input, shape index: {}]
  %s5 = inlined_call_operand.hbm [shape: f32[3,8,128], index: 5, kind: input, shape index: {}]
  %s6 = inlined_call_operand.vmem [shape: f32[3,16,32], index: 6, kind: input, shape index: {}]
  %s7 = inlined_call_operand.vmem [shape: f32[1,128], index: 7, kind: input, shape index: {}]
  %s8 = inlined_call_operand.vmem [shape: f32[1,128], index: 8, kind: input, shape index: {}]
  %s9 = inlined_call_operand.hbm [shape: f32[16,128], index: 9, kind: output, shape index: {}]
  %s10 = sld [smem:[#allocation0]]
  $region58: #{tpu_custom_call.1} parent=0
    _
  %s12 = ssub.s32 1, %s10
  %s13 = scalar_select 0, %s12, %s10
  $region1: #{tpu_custom_call.1} parent=0
    #allocation2 [shape = 'u8[12288]{0}', space=vmem, size = 0x3000, scoped, tag = 'input window, operand 1, single buffered']
    #allocation3 [shape = 's32[1]{0}', space=sflag, size = 0x4, scoped, tag = 'scoped memory for tpu_custom_call.1']
    #allocation4 [shape = 's32[1]{0}', space=sflag, size = 0x4, scoped, tag = 'scoped memory for tpu_custom_call.1']
    #allocation5 [shape = 'u8[49152]{0}', space=vmem, size = 0xc000, scoped, tag = 'input window, operand 2, single buffered']
    #allocation6 [shape = 's32[1]{0}', space=sflag, size = 0x4, scoped, tag = 'scoped memory for tpu_custom_call.1']
    #allocation7 [shape = 'u8[12288]{0}', space=vmem, size = 0x3000, scoped, tag = 'input window, operand 5, single buffered']
    #allocation8 [shape = 'u8[8192]{0}', space=vmem, size = 0x2000, scoped, tag = 'output window, operand 0, single buffered']
    %14 = vsyncpa [#allocation3], 0
    %15 = vsyncpa [#allocation6], 0
    %16 = vsyncpa [#allocation4], 0
    // Predicated region
    $region2: #{tpu_custom_call.1} parent=1 // pred_check
      _
    $region3: #{tpu_custom_call.1} parent=1 // pred_check_branch
      %18 = sbr.rel (0) target = $region5
    $region4: #{tpu_custom_call.1} parent=1 // pred_region
      _
    $region5: #{tpu_custom_call.1} parent=1 // pred_fallthru
      _
    // Predicated region
    $region6: #{tpu_custom_call.1} parent=1 // pred_check
      _
    $region7: #{tpu_custom_call.1} parent=1 // pred_check_branch
      %20 = sbr.rel (0) target = $region9
    $region8: #{tpu_custom_call.1} parent=1 // pred_region
      %s22 = ssub.s32 384, 384
      %23 = vsyncadd [#allocation3], %s22
      %s24 = sshll.u32 [#allocation2], 4
      %s25 = int_to_ptr.vmem [resolvable:$true] %s24
      %30 = dma.hbm_to_vmem [thread:$0]  %s1, 384, %s25, [#allocation3], 128, 128, 8
    $region9: #{tpu_custom_call.1} parent=1 // pred_fallthru
      _
    // Predicated region
    $region10: #{tpu_custom_call.1} parent=1 // pred_check
      _
    $region11: #{tpu_custom_call.1} parent=1 // pred_check_branch
      %32 = sbr.rel (0) target = $region13
    $region12: #{tpu_custom_call.1} parent=1 // pred_region
      %s34 = ssub.s32 1536, 1536
      %35 = vsyncadd [#allocation6], %s34
      %s36 = sshll.u32 [#allocation5], 4
      %s37 = int_to_ptr.vmem [resolvable:$true] %s36
      %42 = dma.hbm_to_vmem [thread:$0]  %s2, 1536, %s37, [#allocation6], 128, 128, 8
    $region13: #{tpu_custom_call.1} parent=1 // pred_fallthru
      _
    // Predicated region
    $region14: #{tpu_custom_call.1} parent=1 // pred_check
      _
    $region15: #{tpu_custom_call.1} parent=1 // pred_check_branch
      %44 = sbr.rel (0) target = $region17
    $region16: #{tpu_custom_call.1} parent=1 // pred_region
      _
    $region17: #{tpu_custom_call.1} parent=1 // pred_fallthru
      _
    // Predicated region
    $region18: #{tpu_custom_call.1} parent=1 // pred_check
      _
    $region19: #{tpu_custom_call.1} parent=1 // pred_check_branch
      %46 = sbr.rel (0) target = $region21
    $region20: #{tpu_custom_call.1} parent=1 // pred_region
      _
    $region21: #{tpu_custom_call.1} parent=1 // pred_fallthru
      _
    // Predicated region
    $region22: #{tpu_custom_call.1} parent=1 // pred_check
      _
    $region23: #{tpu_custom_call.1} parent=1 // pred_check_branch
      %48 = sbr.rel (0) target = $region25
    $region24: #{tpu_custom_call.1} parent=1 // pred_region
      %s50 = ssub.s32 384, 384
      %51 = vsyncadd [#allocation6], %s50
      %s52 = sshll.u32 [#allocation7], 4
      %s53 = int_to_ptr.vmem [resolvable:$true] %s52
      %58 = dma.hbm_to_vmem [thread:$0]  %s5, 384, %s53, [#allocation6], 128, 128, 8
    $region25: #{tpu_custom_call.1} parent=1 // pred_fallthru
      _
    // Predicated region
    $region26: #{tpu_custom_call.1} parent=1 // pred_check
      _
    $region27: #{tpu_custom_call.1} parent=1 // pred_check_branch
      %60 = sbr.rel (0) target = $region29
    $region28: #{tpu_custom_call.1} parent=1 // pred_region
      _
    $region29: #{tpu_custom_call.1} parent=1 // pred_fallthru
      _
    // Predicated region
    $region30: #{tpu_custom_call.1} parent=1 // pred_check
      _
    $region31: #{tpu_custom_call.1} parent=1 // pred_check_branch
      %62 = sbr.rel (0) target = $region33
    $region32: #{tpu_custom_call.1} parent=1 // pred_region
      _
    $region33: #{tpu_custom_call.1} parent=1 // pred_fallthru
      _
    // Predicated region
    $region34: #{tpu_custom_call.1} parent=1 // pred_check
      _
    $region35: #{tpu_custom_call.1} parent=1 // pred_check_branch
      %64 = sbr.rel (0) target = $region37
    $region36: #{tpu_custom_call.1} parent=1 // pred_region
      _
    $region37: #{tpu_custom_call.1} parent=1 // pred_fallthru
      _
    // Predicated region
    $region38: #{tpu_custom_call.1} parent=1 // pred_check
      _
    $region39: #{tpu_custom_call.1} parent=1 // pred_check_branch
      %66 = sbr.rel (0) target = $region41
    $region40: #{tpu_custom_call.1} parent=1 // pred_region
      %67 = dma.done [#allocation3], 384
    $region41: #{tpu_custom_call.1} parent=1 // pred_fallthru
      _
    // Predicated region
    $region42: #{tpu_custom_call.1} parent=1 // pred_check
      _
    $region43: #{tpu_custom_call.1} parent=1 // pred_check_branch
      %69 = sbr.rel (0) target = $region45
    $region44: #{tpu_custom_call.1} parent=1 // pred_region
      %70 = dma.done [#allocation6], 1536
    $region45: #{tpu_custom_call.1} parent=1 // pred_fallthru
      _
    // Predicated region
    $region46: #{tpu_custom_call.1} parent=1 // pred_check
      _
    $region47: #{tpu_custom_call.1} parent=1 // pred_check_branch
      %72 = sbr.rel (0) target = $region49
    $region48: #{tpu_custom_call.1} parent=1 // pred_region
      %73 = dma.done [#allocation6], 384
    $region49: #{tpu_custom_call.1} parent=1 // pred_fallthru
      _
    %v74 = vld [vmem:[%s0] sm:$0xff]
    %v75 = vld [vmem:[%s0 + $0x8] sm:$0xff]
    %v76 = vld [vmem:[%s0 + $0x10] sm:$0xff]
    %v77 = vld [vmem:[%s0 + $0x18] sm:$0xff]
    %v78 = vld [vmem:[#allocation2] sm:$0xff]
    %v79 = vld [vmem:[#allocation2 + $0x8] sm:$0xff]
    %v80 = vld [vmem:[#allocation2 + $0x10] sm:$0xff]
    %v81 = vld [vmem:[#allocation5] sm:$0xff]
    %v82 = vld [vmem:[#allocation5 + $0x8] sm:$0xff]
    %v83 = vld [vmem:[#allocation5 + $0x10] sm:$0xff]
    %v84 = vld [vmem:[#allocation5 + $0x18] sm:$0xff]
    %v85 = vld [vmem:[#allocation5 + $0x20] sm:$0xff]
    %v86 = vld [vmem:[#allocation5 + $0x28] sm:$0xff]
    %v87 = vld [vmem:[#allocation5 + $0x30] sm:$0xff]
    %v88 = vld [vmem:[#allocation5 + $0x38] sm:$0xff]
    %v89 = vld [vmem:[#allocation5 + $0x40] sm:$0xff]
    %v90 = vld [vmem:[#allocation5 + $0x48] sm:$0xff]
    %v91 = vld [vmem:[#allocation5 + $0x50] sm:$0xff]
    %v92 = vld [vmem:[#allocation5 + $0x58] sm:$0xff]
    %v93 = vld [vmem:[%s3] sm:$0x1]
    %v94 = vld [vmem:[%s4] sm:$0x1]
    %vm95 = vcmask 64512
    %v97 = vsel %vm95, %v74, 0
    %v100 = vsel %vm95, %v75, 0
    %v103 = vsel %vm95, %v76, 0
    %v106 = vsel %vm95, %v77, 0
    %108 = vmatprep.subr.mxu0 0.0
    %109 = vmatpush1.msra.mxu0 %v78
    %110 = vmatprep.subr.mxu0 0.0
    %111 = vmatpush1.msra.mxu0 0.0
    %112 = vmatprep.subr.mxu0 0.0
    %113 = vmatpush1.msra.mxu0 0.0
    %114 = vmatprep.subr.mxu0 0.0
    %115 = vmatpush1.msra.mxu0 0.0
    %116 = vmatprep.subr.mxu0 0.0
    %117 = vmatpush1.msra.mxu0 0.0
    %118 = vmatprep.subr.mxu0 0.0
    %119 = vmatpush1.msra.mxu0 0.0
    %120 = vmatprep.subr.mxu0 0.0
    %121 = vmatpush1.msra.mxu0 0.0
    %122 = vmatprep.subr.mxu0 0.0
    %123 = vmatpush1.msra.mxu0 0.0
    %124 = vmatprep.subr.mxu0 0.0
    %125 = vmatpush1.msra.mxu0 0.0
    %126 = vmatprep.subr.mxu0 0.0
    %127 = vmatpush1.msra.mxu0 0.0
    %128 = vmatprep.subr.mxu0 0.0
    %129 = vmatpush1.msra.mxu0 0.0
    %130 = vmatprep.subr.mxu0 0.0
    %131 = vmatpush1.msra.mxu0 0.0
    %132 = vmatprep.subr.mxu0 0.0
    %133 = vmatpush1.msra.mxu0 0.0
    %134 = vmatprep.subr.mxu0 0.0
    %135 = vmatpush1.msra.mxu0 0.0
    %136 = vmatprep.subr.mxu0 0.0
    %137 = vmatpush1.msra.mxu0 0.0
    %138 = vmatprep.subr.mxu0 0.0
    %139 = vmatpush1.msra.mxu0 0.0
    %140 = vmatprep.subr.mxu0 0.0
    %141 = vmatpush1.msra.mxu0 0.0
    %142 = vmatprep.subr.mxu0 0.0
    %143 = vmatpush1.msra.mxu0 0.0
    %144 = vmatprep.subr.mxu0 0.0
    %145 = vmatpush1.msra.mxu0 0.0
    %146 = vmatprep.subr.mxu0 0.0
    %147 = vmatpush1.msra.mxu0 0.0
    %148 = vmatprep.subr.mxu0 0.0
    %149 = vmatpush1.msra.mxu0 0.0
    %150 = vmatprep.subr.mxu0 0.0
    %151 = vmatpush1.msra.mxu0 0.0
    %152 = vmatprep.subr.mxu0 0.0
    %153 = vmatpush1.msra.mxu0 0.0
    %154 = vmatprep.subr.mxu0 0.0
    %155 = vmatpush1.msra.mxu0 0.0
    %156 = vmatprep.subr.mxu0 0.0
    %157 = vmatpush1.msra.mxu0 0.0
    %158 = vmatprep.subr.mxu0 0.0
    %159 = vmatpush1.msra.mxu0 0.0
    %160 = vmatprep.subr.mxu0 0.0
    %161 = vmatpush1.msra.mxu0 0.0
    %162 = vmatprep.subr.mxu0 0.0
    %163 = vmatpush1.msra.mxu0 0.0
    %164 = vmatprep.subr.mxu0 0.0
    %165 = vmatpush1.msra.mxu0 0.0
    %166 = vmatprep.subr.mxu0 0.0
    %167 = vmatpush1.msra.mxu0 0.0
    %168 = vmatprep.subr.mxu0 0.0
    %169 = vmatpush1.msra.mxu0 0.0
    %170 = vmatprep.subr.mxu0 0.0
    %171 = vmatpush1.msra.mxu0 0.0
    %172 = vmatprep.mubr.f32.mxu0 0.0
    %173 = vmatmul.mubr.f32.gmra.mrb[0].mxu0 %v97
    %v174 = vpop.f32.mrb[0].mxu0
    %v175 = vadd.f32 0.0, %v174
    %v176 = vpop.f32.mrb[0].mxu0
    %177 = vmatprep.mubr.f32.mxu0 0.0
    %178 = vmatmul.mubr.f32.gmra.mrb[0].mxu0 %v100
    %v179 = vpop.f32.mrb[0].mxu0
    %v180 = vadd.f32 0.0, %v179
    %v181 = vpop.f32.mrb[0].mxu0
    %182 = vmatprep.mubr.f32.mxu0 0.0
    %183 = vmatmul.mubr.f32.gmra.mrb[0].mxu0 %v103
    %v184 = vpop.f32.mrb[0].mxu0
    %v185 = vadd.f32 0.0, %v184
    %v186 = vpop.f32.mrb[0].mxu0
    %187 = vmatprep.mubr.f32.mxu0 0.0
    %188 = vmatmul.mubr.f32.gmra.mrb[0].mxu0 %v106
    %v189 = vpop.f32.mrb[0].mxu0
    %v190 = vadd.f32 0.0, %v189
    %v191 = vpop.f32.mrb[0].mxu0
    %192 = vdwg.mxu0
    %193 = vmatprep.subr.mxu0 0.0
    %194 = vmatpush1.msra.mxu0 %v79
    %195 = vmatprep.subr.mxu0 0.0
    %196 = vmatpush1.msra.mxu0 0.0
    %197 = vmatprep.subr.mxu0 0.0
    %198 = vmatpush1.msra.mxu0 0.0
    %199 = vmatprep.subr.mxu0 0.0
    %200 = vmatpush1.msra.mxu0 0.0
    %201 = vmatprep.subr.mxu0 0.0
    %202 = vmatpush1.msra.mxu0 0.0
    %203 = vmatprep.subr.mxu0 0.0
    %204 = vmatpush1.msra.mxu0 0.0
    %205 = vmatprep.subr.mxu0 0.0
    %206 = vmatpush1.msra.mxu0 0.0
    %207 = vmatprep.subr.mxu0 0.0
    %208 = vmatpush1.msra.mxu0 0.0
    %209 = vmatprep.subr.mxu0 0.0
    %210 = vmatpush1.msra.mxu0 0.0
    %211 = vmatprep.subr.mxu0 0.0
    %212 = vmatpush1.msra.mxu0 0.0
    %213 = vmatprep.subr.mxu0 0.0
    %214 = vmatpush1.msra.mxu0 0.0
    %215 = vmatprep.subr.mxu0 0.0
    %216 = vmatpush1.msra.mxu0 0.0
    %217 = vmatprep.subr.mxu0 0.0
    %218 = vmatpush1.msra.mxu0 0.0
    %219 = vmatprep.subr.mxu0 0.0
    %220 = vmatpush1.msra.mxu0 0.0
    %221 = vmatprep.subr.mxu0 0.0
    %222 = vmatpush1.msra.mxu0 0.0
    %223 = vmatprep.subr.mxu0 0.0
    %224 = vmatpush1.msra.mxu0 0.0
    %225 = vmatprep.subr.mxu0 0.0
    %226 = vmatpush1.msra.mxu0 0.0
    %227 = vmatprep.subr.mxu0 0.0
    %228 = vmatpush1.msra.mxu0 0.0
    %229 = vmatprep.subr.mxu0 0.0
    %230 = vmatpush1.msra.mxu0 0.0
    %231 = vmatprep.subr.mxu0 0.0
    %232 = vmatpush1.msra.mxu0 0.0
    %233 = vmatprep.subr.mxu0 0.0
    %234 = vmatpush1.msra.mxu0 0.0
    %235 = vmatprep.subr.mxu0 0.0
    %236 = vmatpush1.msra.mxu0 0.0
    %237 = vmatprep.subr.mxu0 0.0
    %238 = vmatpush1.msra.mxu0 0.0
    %239 = vmatprep.subr.mxu0 0.0
    %240 = vmatpush1.msra.mxu0 0.0
    %241 = vmatprep.subr.mxu0 0.0
    %242 = vmatpush1.msra.mxu0 0.0
    %243 = vmatprep.subr.mxu0 0.0
    %244 = vmatpush1.msra.mxu0 0.0
    %245 = vmatprep.subr.mxu0 0.0
    %246 = vmatpush1.msra.mxu0 0.0
    %247 = vmatprep.subr.mxu0 0.0
    %248 = vmatpush1.msra.mxu0 0.0
    %249 = vmatprep.subr.mxu0 0.0
    %250 = vmatpush1.msra.mxu0 0.0
    %251 = vmatprep.subr.mxu0 0.0
    %252 = vmatpush1.msra.mxu0 0.0
    %253 = vmatprep.subr.mxu0 0.0
    %254 = vmatpush1.msra.mxu0 0.0
    %255 = vmatprep.subr.mxu0 0.0
    %256 = vmatpush1.msra.mxu0 0.0
    %257 = vmatprep.mubr.f32.mxu0 0.0
    %258 = vmatmul.mubr.f32.gmra.mrb[0].mxu0 %v97
    %v259 = vpop.f32.mrb[0].mxu0
    %v260 = vadd.f32 0.0, %v259
    %v261 = vpop.f32.mrb[0].mxu0
    %262 = vmatprep.mubr.f32.mxu0 0.0
    %263 = vmatmul.mubr.f32.gmra.mrb[0].mxu0 %v100
    %v264 = vpop.f32.mrb[0].mxu0
    %v265 = vadd.f32 0.0, %v264
    %v266 = vpop.f32.mrb[0].mxu0
    %267 = vmatprep.mubr.f32.mxu0 0.0
    %268 = vmatmul.mubr.f32.gmra.mrb[0].mxu0 %v103
    %v269 = vpop.f32.mrb[0].mxu0
    %v270 = vadd.f32 0.0, %v269
    %v271 = vpop.f32.mrb[0].mxu0
    %272 = vmatprep.mubr.f32.mxu0 0.0
    %273 = vmatmul.mubr.f32.gmra.mrb[0].mxu0 %v106
    %v274 = vpop.f32.mrb[0].mxu0
    %v275 = vadd.f32 0.0, %v274
    %v276 = vpop.f32.mrb[0].mxu0
    %277 = vdwg.mxu0
    %vm278 = vcmask 261120
    %v280 = vsel %vm278, %v85, 0
    %v283 = vsel %vm278, %v86, 0
    %v286 = vsel %vm278, %v87, 0
    %v289 = vsel %vm278, %v88, 0
    %291 = vmatprep.subr.mxu0 0.0
    %292 = vmatpush1.msra.mxu0 %v260
    %293 = vmatprep.subr.mxu0 0.0
    %294 = vmatpush1.msra.mxu0 %v265
    %295 = vmatprep.subr.mxu0 0.0
    %296 = vmatpush1.msra.mxu0 %v270
    %297 = vmatprep.subr.mxu0 0.0
    %298 = vmatpush1.msra.mxu0 %v275
    %299 = vmatprep.subr.mxu0 0.0
    %300 = vmatpush1.msra.mxu0 0.0
    %301 = vmatprep.subr.mxu0 0.0
    %302 = vmatpush1.msra.mxu0 0.0
    %303 = vmatprep.subr.mxu0 0.0
    %304 = vmatpush1.msra.mxu0 0.0
    %305 = vmatprep.subr.mxu0 0.0
    %306 = vmatpush1.msra.mxu0 0.0
    %307 = vmatprep.subr.mxu0 0.0
    %308 = vmatpush1.msra.mxu0 0.0
    %309 = vmatprep.subr.mxu0 0.0
    %310 = vmatpush1.msra.mxu0 0.0
    %311 = vmatprep.subr.mxu0 0.0
    %312 = vmatpush1.msra.mxu0 0.0
    %313 = vmatprep.subr.mxu0 0.0
    %314 = vmatpush1.msra.mxu0 0.0
    %315 = vmatprep.subr.mxu0 0.0
    %316 = vmatpush1.msra.mxu0 0.0
    %317 = vmatprep.subr.mxu0 0.0
    %318 = vmatpush1.msra.mxu0 0.0
    %319 = vmatprep.subr.mxu0 0.0
    %320 = vmatpush1.msra.mxu0 0.0
    %321 = vmatprep.subr.mxu0 0.0
    %322 = vmatpush1.msra.mxu0 0.0
    %323 = vmatprep.subr.mxu0 0.0
    %324 = vmatpush1.msra.mxu0 0.0
    %325 = vmatprep.subr.mxu0 0.0
    %326 = vmatpush1.msra.mxu0 0.0
    %327 = vmatprep.subr.mxu0 0.0
    %328 = vmatpush1.msra.mxu0 0.0
    %329 = vmatprep.subr.mxu0 0.0
    %330 = vmatpush1.msra.mxu0 0.0
    %331 = vmatprep.subr.mxu0 0.0
    %332 = vmatpush1.msra.mxu0 0.0
    %333 = vmatprep.subr.mxu0 0.0
    %334 = vmatpush1.msra.mxu0 0.0
    %335 = vmatprep.subr.mxu0 0.0
    %336 = vmatpush1.msra.mxu0 0.0
    %337 = vmatprep.subr.mxu0 0.0
    %338 = vmatpush1.msra.mxu0 0.0
    %339 = vmatprep.subr.mxu0 0.0
    %340 = vmatpush1.msra.mxu0 0.0
    %341 = vmatprep.subr.mxu0 0.0
    %342 = vmatpush1.msra.mxu0 0.0
    %343 = vmatprep.subr.mxu0 0.0
    %344 = vmatpush1.msra.mxu0 0.0
    %345 = vmatprep.subr.mxu0 0.0
    %346 = vmatpush1.msra.mxu0 0.0
    %347 = vmatprep.subr.mxu0 0.0
    %348 = vmatpush1.msra.mxu0 0.0
    %349 = vmatprep.subr.mxu0 0.0
    %350 = vmatpush1.msra.mxu0 0.0
    %351 = vmatprep.subr.mxu0 0.0
    %352 = vmatpush1.msra.mxu0 0.0
    %353 = vmatprep.subr.mxu0 0.0
    %354 = vmatpush1.msra.mxu0 0.0
    %355 = vmatprep.mubr.f32.mxu0 0.0
    %356 = vmatmul.mubr.f32.gmra.mrb[0].mxu0 %v280
    %v357 = vpop.f32.mrb[0].mxu0
    %v358 = vadd.f32 0.0, %v357
    %v359 = vpop.f32.mrb[0].mxu0
    %360 = vmatprep.mubr.f32.mxu0 0.0
    %361 = vmatmul.mubr.f32.gmra.mrb[0].mxu0 %v283
    %v362 = vpop.f32.mrb[0].mxu0
    %v363 = vadd.f32 0.0, %v362
    %v364 = vpop.f32.mrb[0].mxu0
    %365 = vmatprep.mubr.f32.mxu0 0.0
    %366 = vmatmul.mubr.f32.gmra.mrb[0].mxu0 %v286
    %v367 = vpop.f32.mrb[0].mxu0
    %v368 = vadd.f32 0.0, %v367
    %v369 = vpop.f32.mrb[0].mxu0
    %370 = vmatprep.mubr.f32.mxu0 0.0
    %371 = vmatmul.mubr.f32.gmra.mrb[0].mxu0 %v289
    %v372 = vpop.f32.mrb[0].mxu0
    %v373 = vadd.f32 0.0, %v372
    %v374 = vpop.f32.mrb[0].mxu0
    %375 = vdwg.mxu0
    %v377 = vsel %vm278, %v81, 0
    %v380 = vsel %vm278, %v82, 0
    %v383 = vsel %vm278, %v83, 0
    %v386 = vsel %vm278, %v84, 0
    %388 = vmatprep.subr.mxu0 0.0
    %389 = vmatpush1.msra.mxu0 %v175
    %390 = vmatprep.subr.mxu0 0.0
    %391 = vmatpush1.msra.mxu0 %v180
    %392 = vmatprep.subr.mxu0 0.0
    %393 = vmatpush1.msra.mxu0 %v185
    %394 = vmatprep.subr.mxu0 0.0
    %395 = vmatpush1.msra.mxu0 %v190
    %396 = vmatprep.subr.mxu0 0.0
    %397 = vmatpush1.msra.mxu0 0.0
    %398 = vmatprep.subr.mxu0 0.0
    %399 = vmatpush1.msra.mxu0 0.0
    %400 = vmatprep.subr.mxu0 0.0
    %401 = vmatpush1.msra.mxu0 0.0
    %402 = vmatprep.subr.mxu0 0.0
    %403 = vmatpush1.msra.mxu0 0.0
    %404 = vmatprep.subr.mxu0 0.0
    %405 = vmatpush1.msra.mxu0 0.0
    %406 = vmatprep.subr.mxu0 0.0
    %407 = vmatpush1.msra.mxu0 0.0
    %408 = vmatprep.subr.mxu0 0.0
    %409 = vmatpush1.msra.mxu0 0.0
    %410 = vmatprep.subr.mxu0 0.0
    %411 = vmatpush1.msra.mxu0 0.0
    %412 = vmatprep.subr.mxu0 0.0
    %413 = vmatpush1.msra.mxu0 0.0
    %414 = vmatprep.subr.mxu0 0.0
    %415 = vmatpush1.msra.mxu0 0.0
    %416 = vmatprep.subr.mxu0 0.0
    %417 = vmatpush1.msra.mxu0 0.0
    %418 = vmatprep.subr.mxu0 0.0
    %419 = vmatpush1.msra.mxu0 0.0
    %420 = vmatprep.subr.mxu0 0.0
    %421 = vmatpush1.msra.mxu0 0.0
    %422 = vmatprep.subr.mxu0 0.0
    %423 = vmatpush1.msra.mxu0 0.0
    %424 = vmatprep.subr.mxu0 0.0
    %425 = vmatpush1.msra.mxu0 0.0
    %426 = vmatprep.subr.mxu0 0.0
    %427 = vmatpush1.msra.mxu0 0.0
    %428 = vmatprep.subr.mxu0 0.0
    %429 = vmatpush1.msra.mxu0 0.0
    %430 = vmatprep.subr.mxu0 0.0
    %431 = vmatpush1.msra.mxu0 0.0
    %432 = vmatprep.subr.mxu0 0.0
    %433 = vmatpush1.msra.mxu0 0.0
    %434 = vmatprep.subr.mxu0 0.0
    %435 = vmatpush1.msra.mxu0 0.0
    %436 = vmatprep.subr.mxu0 0.0
    %437 = vmatpush1.msra.mxu0 0.0
    %438 = vmatprep.subr.mxu0 0.0
    %439 = vmatpush1.msra.mxu0 0.0
    %440 = vmatprep.subr.mxu0 0.0
    %441 = vmatpush1.msra.mxu0 0.0
    %442 = vmatprep.subr.mxu0 0.0
    %443 = vmatpush1.msra.mxu0 0.0
    %444 = vmatprep.subr.mxu0 0.0
    %445 = vmatpush1.msra.mxu0 0.0
    %446 = vmatprep.subr.mxu0 0.0
    %447 = vmatpush1.msra.mxu0 0.0
    %448 = vmatprep.subr.mxu0 0.0
    %449 = vmatpush1.msra.mxu0 0.0
    %450 = vmatprep.subr.mxu0 0.0
    %451 = vmatpush1.msra.mxu0 0.0
    %452 = vmatprep.mubr.f32.mxu0 0.0
    %453 = vmatmul.mubr.f32.gmra.mrb[0].mxu0 %v377
    %v454 = vpop.f32.mrb[0].mxu0
    %v455 = vadd.f32 %v358, %v454
    %v456 = vpop.f32.mrb[0].mxu0
    %457 = vmatprep.mubr.f32.mxu0 0.0
    %458 = vmatmul.mubr.f32.gmra.mrb[0].mxu0 %v380
    %v459 = vpop.f32.mrb[0].mxu0
    %v460 = vadd.f32 %v363, %v459
    %v461 = vpop.f32.mrb[0].mxu0
    %462 = vmatprep.mubr.f32.mxu0 0.0
    %463 = vmatmul.mubr.f32.gmra.mrb[0].mxu0 %v383
    %v464 = vpop.f32.mrb[0].mxu0
    %v465 = vadd.f32 %v368, %v464
    %v466 = vpop.f32.mrb[0].mxu0
    %467 = vmatprep.mubr.f32.mxu0 0.0
    %468 = vmatmul.mubr.f32.gmra.mrb[0].mxu0 %v386
    %v469 = vpop.f32.mrb[0].mxu0
    %v470 = vadd.f32 %v373, %v469
    %v471 = vpop.f32.mrb[0].mxu0
    %472 = vdwg.mxu0
    %473 = vmatprep.subr.mxu0 0.0
    %474 = vmatpush1.msra.mxu0 %v80
    %475 = vmatprep.subr.mxu0 0.0
    %476 = vmatpush1.msra.mxu0 0.0
    %477 = vmatprep.subr.mxu0 0.0
    %478 = vmatpush1.msra.mxu0 0.0
    %479 = vmatprep.subr.mxu0 0.0
    %480 = vmatpush1.msra.mxu0 0.0
    %481 = vmatprep.subr.mxu0 0.0
    %482 = vmatpush1.msra.mxu0 0.0
    %483 = vmatprep.subr.mxu0 0.0
    %484 = vmatpush1.msra.mxu0 0.0
    %485 = vmatprep.subr.mxu0 0.0
    %486 = vmatpush1.msra.mxu0 0.0
    %487 = vmatprep.subr.mxu0 0.0
    %488 = vmatpush1.msra.mxu0 0.0
    %489 = vmatprep.subr.mxu0 0.0
    %490 = vmatpush1.msra.mxu0 0.0
    %491 = vmatprep.subr.mxu0 0.0
    %492 = vmatpush1.msra.mxu0 0.0
    %493 = vmatprep.subr.mxu0 0.0
    %494 = vmatpush1.msra.mxu0 0.0
    %495 = vmatprep.subr.mxu0 0.0
    %496 = vmatpush1.msra.mxu0 0.0
    %497 = vmatprep.subr.mxu0 0.0
    %498 = vmatpush1.msra.mxu0 0.0
    %499 = vmatprep.subr.mxu0 0.0
    %500 = vmatpush1.msra.mxu0 0.0
    %501 = vmatprep.subr.mxu0 0.0
    %502 = vmatpush1.msra.mxu0 0.0
    %503 = vmatprep.subr.mxu0 0.0
    %504 = vmatpush1.msra.mxu0 0.0
    %505 = vmatprep.subr.mxu0 0.0
    %506 = vmatpush1.msra.mxu0 0.0
    %507 = vmatprep.subr.mxu0 0.0
    %508 = vmatpush1.msra.mxu0 0.0
    %509 = vmatprep.subr.mxu0 0.0
    %510 = vmatpush1.msra.mxu0 0.0
    %511 = vmatprep.subr.mxu0 0.0
    %512 = vmatpush1.msra.mxu0 0.0
    %513 = vmatprep.subr.mxu0 0.0
    %514 = vmatpush1.msra.mxu0 0.0
    %515 = vmatprep.subr.mxu0 0.0
    %516 = vmatpush1.msra.mxu0 0.0
    %517 = vmatprep.subr.mxu0 0.0
    %518 = vmatpush1.msra.mxu0 0.0
    %519 = vmatprep.subr.mxu0 0.0
    %520 = vmatpush1.msra.mxu0 0.0
    %521 = vmatprep.subr.mxu0 0.0
    %522 = vmatpush1.msra.mxu0 0.0
    %523 = vmatprep.subr.mxu0 0.0
    %524 = vmatpush1.msra.mxu0 0.0
    %525 = vmatprep.subr.mxu0 0.0
    %526 = vmatpush1.msra.mxu0 0.0
    %527 = vmatprep.subr.mxu0 0.0
    %528 = vmatpush1.msra.mxu0 0.0
    %529 = vmatprep.subr.mxu0 0.0
    %530 = vmatpush1.msra.mxu0 0.0
    %531 = vmatprep.subr.mxu0 0.0
    %532 = vmatpush1.msra.mxu0 0.0
    %533 = vmatprep.subr.mxu0 0.0
    %534 = vmatpush1.msra.mxu0 0.0
    %535 = vmatprep.subr.mxu0 0.0
    %536 = vmatpush1.msra.mxu0 0.0
    %537 = vmatprep.mubr.f32.mxu0 0.0
    %538 = vmatmul.mubr.f32.gmra.mrb[0].mxu0 %v97
    %v539 = vpop.f32.mrb[0].mxu0
    %v540 = vadd.f32 0.0, %v539
    %v541 = vpop.f32.mrb[0].mxu0
    %542 = vmatprep.mubr.f32.mxu0 0.0
    %543 = vmatmul.mubr.f32.gmra.mrb[0].mxu0 %v100
    %v544 = vpop.f32.mrb[0].mxu0
    %v545 = vadd.f32 0.0, %v544
    %v546 = vpop.f32.mrb[0].mxu0
    %547 = vmatprep.mubr.f32.mxu0 0.0
    %548 = vmatmul.mubr.f32.gmra.mrb[0].mxu0 %v103
    %v549 = vpop.f32.mrb[0].mxu0
    %v550 = vadd.f32 0.0, %v549
    %v551 = vpop.f32.mrb[0].mxu0
    %552 = vmatprep.mubr.f32.mxu0 0.0
    %553 = vmatmul.mubr.f32.gmra.mrb[0].mxu0 %v106
    %v554 = vpop.f32.mrb[0].mxu0
    %v555 = vadd.f32 0.0, %v554
    %v556 = vpop.f32.mrb[0].mxu0
    %557 = vdwg.mxu0
    %v559 = vsel %vm278, %v89, 0
    %v562 = vsel %vm278, %v90, 0
    %v565 = vsel %vm278, %v91, 0
    %v568 = vsel %vm278, %v92, 0
    %570 = vmatprep.subr.mxu0 0.0
    %571 = vmatpush1.msra.mxu0 %v540
    %572 = vmatprep.subr.mxu0 0.0
    %573 = vmatpush1.msra.mxu0 %v545
    %574 = vmatprep.subr.mxu0 0.0
    %575 = vmatpush1.msra.mxu0 %v550
    %576 = vmatprep.subr.mxu0 0.0
    %577 = vmatpush1.msra.mxu0 %v555
    %578 = vmatprep.subr.mxu0 0.0
    %579 = vmatpush1.msra.mxu0 0.0
    %580 = vmatprep.subr.mxu0 0.0
    %581 = vmatpush1.msra.mxu0 0.0
    %582 = vmatprep.subr.mxu0 0.0
    %583 = vmatpush1.msra.mxu0 0.0
    %584 = vmatprep.subr.mxu0 0.0
    %585 = vmatpush1.msra.mxu0 0.0
    %586 = vmatprep.subr.mxu0 0.0
    %587 = vmatpush1.msra.mxu0 0.0
    %588 = vmatprep.subr.mxu0 0.0
    %589 = vmatpush1.msra.mxu0 0.0
    %590 = vmatprep.subr.mxu0 0.0
    %591 = vmatpush1.msra.mxu0 0.0
    %592 = vmatprep.subr.mxu0 0.0
    %593 = vmatpush1.msra.mxu0 0.0
    %594 = vmatprep.subr.mxu0 0.0
    %595 = vmatpush1.msra.mxu0 0.0
    %596 = vmatprep.subr.mxu0 0.0
    %597 = vmatpush1.msra.mxu0 0.0
    %598 = vmatprep.subr.mxu0 0.0
    %599 = vmatpush1.msra.mxu0 0.0
    %600 = vmatprep.subr.mxu0 0.0
    %601 = vmatpush1.msra.mxu0 0.0
    %602 = vmatprep.subr.mxu0 0.0
    %603 = vmatpush1.msra.mxu0 0.0
    %604 = vmatprep.subr.mxu0 0.0
    %605 = vmatpush1.msra.mxu0 0.0
    %606 = vmatprep.subr.mxu0 0.0
    %607 = vmatpush1.msra.mxu0 0.0
    %608 = vmatprep.subr.mxu0 0.0
    %609 = vmatpush1.msra.mxu0 0.0
    %610 = vmatprep.subr.mxu0 0.0
    %611 = vmatpush1.msra.mxu0 0.0
    %612 = vmatprep.subr.mxu0 0.0
    %613 = vmatpush1.msra.mxu0 0.0
    %614 = vmatprep.subr.mxu0 0.0
    %615 = vmatpush1.msra.mxu0 0.0
    %616 = vmatprep.subr.mxu0 0.0
    %617 = vmatpush1.msra.mxu0 0.0
    %618 = vmatprep.subr.mxu0 0.0
    %619 = vmatpush1.msra.mxu0 0.0
    %620 = vmatprep.subr.mxu0 0.0
    %621 = vmatpush1.msra.mxu0 0.0
    %622 = vmatprep.subr.mxu0 0.0
    %623 = vmatpush1.msra.mxu0 0.0
    %624 = vmatprep.subr.mxu0 0.0
    %625 = vmatpush1.msra.mxu0 0.0
    %626 = vmatprep.subr.mxu0 0.0
    %627 = vmatpush1.msra.mxu0 0.0
    %628 = vmatprep.subr.mxu0 0.0
    %629 = vmatpush1.msra.mxu0 0.0
    %630 = vmatprep.subr.mxu0 0.0
    %631 = vmatpush1.msra.mxu0 0.0
    %632 = vmatprep.subr.mxu0 0.0
    %633 = vmatpush1.msra.mxu0 0.0
    %634 = vmatprep.mubr.f32.mxu0 0.0
    %635 = vmatmul.mubr.f32.gmra.mrb[0].mxu0 %v559
    %v636 = vpop.f32.mrb[0].mxu0
    %v637 = vadd.f32 0.0, %v636
    %v638 = vpop.f32.mrb[0].mxu0
    %639 = vmatprep.mubr.f32.mxu0 0.0
    %640 = vmatmul.mubr.f32.gmra.mrb[0].mxu0 %v562
    %v641 = vpop.f32.mrb[0].mxu0
    %v642 = vadd.f32 0.0, %v641
    %v643 = vpop.f32.mrb[0].mxu0
    %644 = vmatprep.mubr.f32.mxu0 0.0
    %645 = vmatmul.mubr.f32.gmra.mrb[0].mxu0 %v565
    %v646 = vpop.f32.mrb[0].mxu0
    %v647 = vadd.f32 0.0, %v646
    %v648 = vpop.f32.mrb[0].mxu0
    %649 = vmatprep.mubr.f32.mxu0 0.0
    %650 = vmatmul.mubr.f32.gmra.mrb[0].mxu0 %v568
    %v651 = vpop.f32.mrb[0].mxu0
    %v652 = vadd.f32 0.0, %v651
    %v653 = vpop.f32.mrb[0].mxu0
    %654 = vdwg.mxu0
    %v655 = vadd.f32 %v455, %v637
    %v656 = vadd.f32 %v460, %v642
    %v657 = vadd.f32 %v465, %v647
    %v658 = vadd.f32 %v470, %v652
    %v659 = vadd.f32 %v655, %v656
    %v660 = vadd.f32 %v659, %v657
    %v661 = vadd.f32 %v660, %v658
    %v662 = vrot.slane %v661, 4
    %v663 = vadd.f32 %v661, %v662
    %v664 = vrot.slane %v663, 2
    %v665 = vadd.f32 %v663, %v664
    %v666 = vrot.slane %v665, 1
    %v667 = vadd.f32 %v665, %v666
    %v668 = vmul.f32 %v667, 0.03125
    %v669 = vmul.f32 %v655, %v655
    %v670 = vmul.f32 %v656, %v656
    %v671 = vmul.f32 %v657, %v657
    %v672 = vmul.f32 %v658, %v658
    %v673 = vadd.f32 %v669, %v670
    %v674 = vadd.f32 %v673, %v671
    %v675 = vadd.f32 %v674, %v672
    %v676 = vrot.slane %v675, 4
    %v677 = vadd.f32 %v675, %v676
    %v678 = vrot.slane %v677, 2
    %v679 = vadd.f32 %v677, %v678
    %v680 = vrot.slane %v679, 1
    %v681 = vadd.f32 %v679, %v680
    %v682 = vmul.f32 %v681, 0.03125
    %v683 = vmul.f32 %v668, %v668
    %v684 = vsub.f32 %v682, %v683
    %v685 = vmax.f32 %v684, 0.0
    %v686 = vadd.f32 %v685, 1e-05
    %v687 = vrsqrt.pop %v686
    %v688 = vmul.f32 %v93, %v687
    %v689 = vmul.f32 %v668, %v688
    %v690 = vsub.f32 %v94, %v689
    %v692 = vlaneseq
    %v693 = vshrl.u32 %v692, 7
    %v694 = vsub.s32 0, %v693
    %v695 = vrot.slane %v688, %v694
    %v697 = vmul.f32 %v655, %v695
    %v698 = vmul.f32 %v656, %v695
    %v699 = vmul.f32 %v657, %v695
    %v700 = vmul.f32 %v658, %v695
    %v702 = vlaneseq
    %v703 = vshrl.u32 %v702, 7
    %v704 = vsub.s32 0, %v703
    %v705 = vrot.slane %v690, %v704
    %v707 = vadd.f32 %v697, %v705
    %v708 = vadd.f32 %v698, %v705
    %v709 = vadd.f32 %v699, %v705
    %v710 = vadd.f32 %v700, %v705
    %v711 = vmax.f32 %v707, 0.0
    %v712 = vmax.f32 %v708, 0.0
    %v713 = vmax.f32 %v709, 0.0
    %v714 = vmax.f32 %v710, 0.0
    %v715 = vld [vmem:[#allocation7] sm:$0xff]
    %v716 = vld [vmem:[#allocation7 + $0x8] sm:$0xff]
    %v717 = vld [vmem:[#allocation7 + $0x10] sm:$0xff]
    %v718 = vld [vmem:[%s6] sm:$0xff]
    %v719 = vld [vmem:[%s6 + $0x8] sm:$0xff]
    %v720 = vld [vmem:[%s6 + $0x10] sm:$0xff]
    %v721 = vld [vmem:[%s6 + $0x18] sm:$0xff]
    %v722 = vld [vmem:[%s6 + $0x20] sm:$0xff]
    %v723 = vld [vmem:[%s6 + $0x28] sm:$0xff]
    %v724 = vld [vmem:[%s7] sm:$0x1]
    %v725 = vld [vmem:[%s8] sm:$0x1]
    %v727 = vsel %vm95, %v711, 0
    %v730 = vsel %vm95, %v712, 0
    %v733 = vsel %vm95, %v713, 0
    %v736 = vsel %vm95, %v714, 0
    %738 = vmatprep.subr.mxu0 0.0
    %739 = vmatpush1.msra.mxu0 %v715
    %740 = vmatprep.subr.mxu0 0.0
    %741 = vmatpush1.msra.mxu0 0.0
    %742 = vmatprep.subr.mxu0 0.0
    %743 = vmatpush1.msra.mxu0 0.0
    %744 = vmatprep.subr.mxu0 0.0
    %745 = vmatpush1.msra.mxu0 0.0
    %746 = vmatprep.subr.mxu0 0.0
    %747 = vmatpush1.msra.mxu0 0.0
    %748 = vmatprep.subr.mxu0 0.0
    %749 = vmatpush1.msra.mxu0 0.0
    %750 = vmatprep.subr.mxu0 0.0
    %751 = vmatpush1.msra.mxu0 0.0
    %752 = vmatprep.subr.mxu0 0.0
    %753 = vmatpush1.msra.mxu0 0.0
    %754 = vmatprep.subr.mxu0 0.0
    %755 = vmatpush1.msra.mxu0 0.0
    %756 = vmatprep.subr.mxu0 0.0
    %757 = vmatpush1.msra.mxu0 0.0
    %758 = vmatprep.subr.mxu0 0.0
    %759 = vmatpush1.msra.mxu0 0.0
    %760 = vmatprep.subr.mxu0 0.0
    %761 = vmatpush1.msra.mxu0 0.0
    %762 = vmatprep.subr.mxu0 0.0
    %763 = vmatpush1.msra.mxu0 0.0
    %764 = vmatprep.subr.mxu0 0.0
    %765 = vmatpush1.msra.mxu0 0.0
    %766 = vmatprep.subr.mxu0 0.0
    %767 = vmatpush1.msra.mxu0 0.0
    %768 = vmatprep.subr.mxu0 0.0
    %769 = vmatpush1.msra.mxu0 0.0
    %770 = vmatprep.subr.mxu0 0.0
    %771 = vmatpush1.msra.mxu0 0.0
    %772 = vmatprep.subr.mxu0 0.0
    %773 = vmatpush1.msra.mxu0 0.0
    %774 = vmatprep.subr.mxu0 0.0
    %775 = vmatpush1.msra.mxu0 0.0
    %776 = vmatprep.subr.mxu0 0.0
    %777 = vmatpush1.msra.mxu0 0.0
    %778 = vmatprep.subr.mxu0 0.0
    %779 = vmatpush1.msra.mxu0 0.0
    %780 = vmatprep.subr.mxu0 0.0
    %781 = vmatpush1.msra.mxu0 0.0
    %782 = vmatprep.subr.mxu0 0.0
    %783 = vmatpush1.msra.mxu0 0.0
    %784 = vmatprep.subr.mxu0 0.0
    %785 = vmatpush1.msra.mxu0 0.0
    %786 = vmatprep.subr.mxu0 0.0
    %787 = vmatpush1.msra.mxu0 0.0
    %788 = vmatprep.subr.mxu0 0.0
    %789 = vmatpush1.msra.mxu0 0.0
    %790 = vmatprep.subr.mxu0 0.0
    %791 = vmatpush1.msra.mxu0 0.0
    %792 = vmatprep.subr.mxu0 0.0
    %793 = vmatpush1.msra.mxu0 0.0
    %794 = vmatprep.subr.mxu0 0.0
    %795 = vmatpush1.msra.mxu0 0.0
    %796 = vmatprep.subr.mxu0 0.0
    %797 = vmatpush1.msra.mxu0 0.0
    %798 = vmatprep.subr.mxu0 0.0
    %799 = vmatpush1.msra.mxu0 0.0
    %800 = vmatprep.subr.mxu0 0.0
    %801 = vmatpush1.msra.mxu0 0.0
    %802 = vmatprep.mubr.f32.mxu0 0.0
    %803 = vmatmul.mubr.f32.gmra.mrb[0].mxu0 %v727
    %v804 = vpop.f32.mrb[0].mxu0
    %v805 = vadd.f32 0.0, %v804
    %v806 = vpop.f32.mrb[0].mxu0
    %807 = vmatprep.mubr.f32.mxu0 0.0
    %808 = vmatmul.mubr.f32.gmra.mrb[0].mxu0 %v730
    %v809 = vpop.f32.mrb[0].mxu0
    %v810 = vadd.f32 0.0, %v809
    %v811 = vpop.f32.mrb[0].mxu0
    %812 = vmatprep.mubr.f32.mxu0 0.0
    %813 = vmatmul.mubr.f32.gmra.mrb[0].mxu0 %v733
    %v814 = vpop.f32.mrb[0].mxu0
    %v815 = vadd.f32 0.0, %v814
    %v816 = vpop.f32.mrb[0].mxu0
    %817 = vmatprep.mubr.f32.mxu0 0.0
    %818 = vmatmul.mubr.f32.gmra.mrb[0].mxu0 %v736
    %v819 = vpop.f32.mrb[0].mxu0
    %v820 = vadd.f32 0.0, %v819
    %v821 = vpop.f32.mrb[0].mxu0
    %822 = vdwg.mxu0
    %823 = vmatprep.subr.mxu0 0.0
    %824 = vmatpush1.msra.mxu0 %v716
    %825 = vmatprep.subr.mxu0 0.0
    %826 = vmatpush1.msra.mxu0 0.0
    %827 = vmatprep.subr.mxu0 0.0
    %828 = vmatpush1.msra.mxu0 0.0
    %829 = vmatprep.subr.mxu0 0.0
    %830 = vmatpush1.msra.mxu0 0.0
    %831 = vmatprep.subr.mxu0 0.0
    %832 = vmatpush1.msra.mxu0 0.0
    %833 = vmatprep.subr.mxu0 0.0
    %834 = vmatpush1.msra.mxu0 0.0
    %835 = vmatprep.subr.mxu0 0.0
    %836 = vmatpush1.msra.mxu0 0.0
    %837 = vmatprep.subr.mxu0 0.0
    %838 = vmatpush1.msra.mxu0 0.0
    %839 = vmatprep.subr.mxu0 0.0
    %840 = vmatpush1.msra.mxu0 0.0
    %841 = vmatprep.subr.mxu0 0.0
    %842 = vmatpush1.msra.mxu0 0.0
    %843 = vmatprep.subr.mxu0 0.0
    %844 = vmatpush1.msra.mxu0 0.0
    %845 = vmatprep.subr.mxu0 0.0
    %846 = vmatpush1.msra.mxu0 0.0
    %847 = vmatprep.subr.mxu0 0.0
    %848 = vmatpush1.msra.mxu0 0.0
    %849 = vmatprep.subr.mxu0 0.0
    %850 = vmatpush1.msra.mxu0 0.0
    %851 = vmatprep.subr.mxu0 0.0
    %852 = vmatpush1.msra.mxu0 0.0
    %853 = vmatprep.subr.mxu0 0.0
    %854 = vmatpush1.msra.mxu0 0.0
    %855 = vmatprep.subr.mxu0 0.0
    %856 = vmatpush1.msra.mxu0 0.0
    %857 = vmatprep.subr.mxu0 0.0
    %858 = vmatpush1.msra.mxu0 0.0
    %859 = vmatprep.subr.mxu0 0.0
    %860 = vmatpush1.msra.mxu0 0.0
    %861 = vmatprep.subr.mxu0 0.0
    %862 = vmatpush1.msra.mxu0 0.0
    %863 = vmatprep.subr.mxu0 0.0
    %864 = vmatpush1.msra.mxu0 0.0
    %865 = vmatprep.subr.mxu0 0.0
    %866 = vmatpush1.msra.mxu0 0.0
    %867 = vmatprep.subr.mxu0 0.0
    %868 = vmatpush1.msra.mxu0 0.0
    %869 = vmatprep.subr.mxu0 0.0
    %870 = vmatpush1.msra.mxu0 0.0
    %871 = vmatprep.subr.mxu0 0.0
    %872 = vmatpush1.msra.mxu0 0.0
    %873 = vmatprep.subr.mxu0 0.0
    %874 = vmatpush1.msra.mxu0 0.0
    %875 = vmatprep.subr.mxu0 0.0
    %876 = vmatpush1.msra.mxu0 0.0
    %877 = vmatprep.subr.mxu0 0.0
    %878 = vmatpush1.msra.mxu0 0.0
    %879 = vmatprep.subr.mxu0 0.0
    %880 = vmatpush1.msra.mxu0 0.0
    %881 = vmatprep.subr.mxu0 0.0
    %882 = vmatpush1.msra.mxu0 0.0
    %883 = vmatprep.subr.mxu0 0.0
    %884 = vmatpush1.msra.mxu0 0.0
    %885 = vmatprep.subr.mxu0 0.0
    %886 = vmatpush1.msra.mxu0 0.0
    %887 = vmatprep.mubr.f32.mxu0 0.0
    %888 = vmatmul.mubr.f32.gmra.mrb[0].mxu0 %v727
    %v889 = vpop.f32.mrb[0].mxu0
    %v890 = vadd.f32 0.0, %v889
    %v891 = vpop.f32.mrb[0].mxu0
    %892 = vmatprep.mubr.f32.mxu0 0.0
    %893 = vmatmul.mubr.f32.gmra.mrb[0].mxu0 %v730
    %v894 = vpop.f32.mrb[0].mxu0
    %v895 = vadd.f32 0.0, %v894
    %v896 = vpop.f32.mrb[0].mxu0
    %897 = vmatprep.mubr.f32.mxu0 0.0
    %898 = vmatmul.mubr.f32.gmra.mrb[0].mxu0 %v733
    %v899 = vpop.f32.mrb[0].mxu0
    %v900 = vadd.f32 0.0, %v899
    %v901 = vpop.f32.mrb[0].mxu0
    %902 = vmatprep.mubr.f32.mxu0 0.0
    %903 = vmatmul.mubr.f32.gmra.mrb[0].mxu0 %v736
    %v904 = vpop.f32.mrb[0].mxu0
    %v905 = vadd.f32 0.0, %v904
    %v906 = vpop.f32.mrb[0].mxu0
    %907 = vdwg.mxu0
    %v909 = vsel %vm278, %v720, 0
    %v912 = vsel %vm278, %v721, 0
    %914 = vmatprep.subr.mxu0 0.0
    %915 = vmatpush1.msra.mxu0 %v890
    %916 = vmatprep.subr.mxu0 0.0
    %917 = vmatpush1.msra.mxu0 %v895
    %918 = vmatprep.subr.mxu0 0.0
    %919 = vmatpush1.msra.mxu0 %v900
    %920 = vmatprep.subr.mxu0 0.0
    %921 = vmatpush1.msra.mxu0 %v905
    %922 = vmatprep.subr.mxu0 0.0
    %923 = vmatpush1.msra.mxu0 0.0
    %924 = vmatprep.subr.mxu0 0.0
    %925 = vmatpush1.msra.mxu0 0.0
    %926 = vmatprep.subr.mxu0 0.0
    %927 = vmatpush1.msra.mxu0 0.0
    %928 = vmatprep.subr.mxu0 0.0
    %929 = vmatpush1.msra.mxu0 0.0
    %930 = vmatprep.subr.mxu0 0.0
    %931 = vmatpush1.msra.mxu0 0.0
    %932 = vmatprep.subr.mxu0 0.0
    %933 = vmatpush1.msra.mxu0 0.0
    %934 = vmatprep.subr.mxu0 0.0
    %935 = vmatpush1.msra.mxu0 0.0
    %936 = vmatprep.subr.mxu0 0.0
    %937 = vmatpush1.msra.mxu0 0.0
    %938 = vmatprep.subr.mxu0 0.0
    %939 = vmatpush1.msra.mxu0 0.0
    %940 = vmatprep.subr.mxu0 0.0
    %941 = vmatpush1.msra.mxu0 0.0
    %942 = vmatprep.subr.mxu0 0.0
    %943 = vmatpush1.msra.mxu0 0.0
    %944 = vmatprep.subr.mxu0 0.0
    %945 = vmatpush1.msra.mxu0 0.0
    %946 = vmatprep.subr.mxu0 0.0
    %947 = vmatpush1.msra.mxu0 0.0
    %948 = vmatprep.subr.mxu0 0.0
    %949 = vmatpush1.msra.mxu0 0.0
    %950 = vmatprep.subr.mxu0 0.0
    %951 = vmatpush1.msra.mxu0 0.0
    %952 = vmatprep.subr.mxu0 0.0
    %953 = vmatpush1.msra.mxu0 0.0
    %954 = vmatprep.subr.mxu0 0.0
    %955 = vmatpush1.msra.mxu0 0.0
    %956 = vmatprep.subr.mxu0 0.0
    %957 = vmatpush1.msra.mxu0 0.0
    %958 = vmatprep.subr.mxu0 0.0
    %959 = vmatpush1.msra.mxu0 0.0
    %960 = vmatprep.subr.mxu0 0.0
    %961 = vmatpush1.msra.mxu0 0.0
    %962 = vmatprep.subr.mxu0 0.0
    %963 = vmatpush1.msra.mxu0 0.0
    %964 = vmatprep.subr.mxu0 0.0
    %965 = vmatpush1.msra.mxu0 0.0
    %966 = vmatprep.subr.mxu0 0.0
    %967 = vmatpush1.msra.mxu0 0.0
    %968 = vmatprep.subr.mxu0 0.0
    %969 = vmatpush1.msra.mxu0 0.0
    %970 = vmatprep.subr.mxu0 0.0
    %971 = vmatpush1.msra.mxu0 0.0
    %972 = vmatprep.subr.mxu0 0.0
    %973 = vmatpush1.msra.mxu0 0.0
    %974 = vmatprep.subr.mxu0 0.0
    %975 = vmatpush1.msra.mxu0 0.0
    %976 = vmatprep.subr.mxu0 0.0
    %977 = vmatpush1.msra.mxu0 0.0
    %978 = vmatprep.mubr.f32.mxu0 0.0
    %979 = vmatmul.mubr.f32.gmra.mrb[0].mxu0 %v909
    %v980 = vpop.f32.mrb[0].mxu0
    %v981 = vadd.f32 0.0, %v980
    %v982 = vpop.f32.mrb[0].mxu0
    %983 = vmatprep.mubr.f32.mxu0 0.0
    %984 = vmatmul.mubr.f32.gmra.mrb[0].mxu0 %v912
    %v985 = vpop.f32.mrb[0].mxu0
    %v986 = vadd.f32 0.0, %v985
    %v987 = vpop.f32.mrb[0].mxu0
    %988 = vdwg.mxu0
    %v990 = vsel %vm278, %v718, 0
    %v993 = vsel %vm278, %v719, 0
    %995 = vmatprep.subr.mxu0 0.0
    %996 = vmatpush1.msra.mxu0 %v805
    %997 = vmatprep.subr.mxu0 0.0
    %998 = vmatpush1.msra.mxu0 %v810
    %999 = vmatprep.subr.mxu0 0.0
    %1000 = vmatpush1.msra.mxu0 %v815
    %1001 = vmatprep.subr.mxu0 0.0
    %1002 = vmatpush1.msra.mxu0 %v820
    %1003 = vmatprep.subr.mxu0 0.0
    %1004 = vmatpush1.msra.mxu0 0.0
    %1005 = vmatprep.subr.mxu0 0.0
    %1006 = vmatpush1.msra.mxu0 0.0
    %1007 = vmatprep.subr.mxu0 0.0
    %1008 = vmatpush1.msra.mxu0 0.0
    %1009 = vmatprep.subr.mxu0 0.0
    %1010 = vmatpush1.msra.mxu0 0.0
    %1011 = vmatprep.subr.mxu0 0.0
    %1012 = vmatpush1.msra.mxu0 0.0
    %1013 = vmatprep.subr.mxu0 0.0
    %1014 = vmatpush1.msra.mxu0 0.0
    %1015 = vmatprep.subr.mxu0 0.0
    %1016 = vmatpush1.msra.mxu0 0.0
    %1017 = vmatprep.subr.mxu0 0.0
    %1018 = vmatpush1.msra.mxu0 0.0
    %1019 = vmatprep.subr.mxu0 0.0
    %1020 = vmatpush1.msra.mxu0 0.0
    %1021 = vmatprep.subr.mxu0 0.0
    %1022 = vmatpush1.msra.mxu0 0.0
    %1023 = vmatprep.subr.mxu0 0.0
    %1024 = vmatpush1.msra.mxu0 0.0
    %1025 = vmatprep.subr.mxu0 0.0
    %1026 = vmatpush1.msra.mxu0 0.0
    %1027 = vmatprep.subr.mxu0 0.0
    %1028 = vmatpush1.msra.mxu0 0.0
    %1029 = vmatprep.subr.mxu0 0.0
    %1030 = vmatpush1.msra.mxu0 0.0
    %1031 = vmatprep.subr.mxu0 0.0
    %1032 = vmatpush1.msra.mxu0 0.0
    %1033 = vmatprep.subr.mxu0 0.0
    %1034 = vmatpush1.msra.mxu0 0.0
    %1035 = vmatprep.subr.mxu0 0.0
    %1036 = vmatpush1.msra.mxu0 0.0
    %1037 = vmatprep.subr.mxu0 0.0
    %1038 = vmatpush1.msra.mxu0 0.0
    %1039 = vmatprep.subr.mxu0 0.0
    %1040 = vmatpush1.msra.mxu0 0.0
    %1041 = vmatprep.subr.mxu0 0.0
    %1042 = vmatpush1.msra.mxu0 0.0
    %1043 = vmatprep.subr.mxu0 0.0
    %1044 = vmatpush1.msra.mxu0 0.0
    %1045 = vmatprep.subr.mxu0 0.0
    %1046 = vmatpush1.msra.mxu0 0.0
    %1047 = vmatprep.subr.mxu0 0.0
    %1048 = vmatpush1.msra.mxu0 0.0
    %1049 = vmatprep.subr.mxu0 0.0
    %1050 = vmatpush1.msra.mxu0 0.0
    %1051 = vmatprep.subr.mxu0 0.0
    %1052 = vmatpush1.msra.mxu0 0.0
    %1053 = vmatprep.subr.mxu0 0.0
    %1054 = vmatpush1.msra.mxu0 0.0
    %1055 = vmatprep.subr.mxu0 0.0
    %1056 = vmatpush1.msra.mxu0 0.0
    %1057 = vmatprep.subr.mxu0 0.0
    %1058 = vmatpush1.msra.mxu0 0.0
    %1059 = vmatprep.mubr.f32.mxu0 0.0
    %1060 = vmatmul.mubr.f32.gmra.mrb[0].mxu0 %v990
    %v1061 = vpop.f32.mrb[0].mxu0
    %v1062 = vadd.f32 %v981, %v1061
    %v1063 = vpop.f32.mrb[0].mxu0
    %1064 = vmatprep.mubr.f32.mxu0 0.0
    %1065 = vmatmul.mubr.f32.gmra.mrb[0].mxu0 %v993
    %v1066 = vpop.f32.mrb[0].mxu0
    %v1067 = vadd.f32 %v986, %v1066
    %v1068 = vpop.f32.mrb[0].mxu0
    %1069 = vdwg.mxu0
    %1070 = vmatprep.subr.mxu0 0.0
    %1071 = vmatpush1.msra.mxu0 %v717
    %1072 = vmatprep.subr.mxu0 0.0
    %1073 = vmatpush1.msra.mxu0 0.0
    %1074 = vmatprep.subr.mxu0 0.0
    %1075 = vmatpush1.msra.mxu0 0.0
    %1076 = vmatprep.subr.mxu0 0.0
    %1077 = vmatpush1.msra.mxu0 0.0
    %1078 = vmatprep.subr.mxu0 0.0
    %1079 = vmatpush1.msra.mxu0 0.0
    %1080 = vmatprep.subr.mxu0 0.0
    %1081 = vmatpush1.msra.mxu0 0.0
    %1082 = vmatprep.subr.mxu0 0.0
    %1083 = vmatpush1.msra.mxu0 0.0
    %1084 = vmatprep.subr.mxu0 0.0
    %1085 = vmatpush1.msra.mxu0 0.0
    %1086 = vmatprep.subr.mxu0 0.0
    %1087 = vmatpush1.msra.mxu0 0.0
    %1088 = vmatprep.subr.mxu0 0.0
    %1089 = vmatpush1.msra.mxu0 0.0
    %1090 = vmatprep.subr.mxu0 0.0
    %1091 = vmatpush1.msra.mxu0 0.0
    %1092 = vmatprep.subr.mxu0 0.0
    %1093 = vmatpush1.msra.mxu0 0.0
    %1094 = vmatprep.subr.mxu0 0.0
    %1095 = vmatpush1.msra.mxu0 0.0
    %1096 = vmatprep.subr.mxu0 0.0
    %1097 = vmatpush1.msra.mxu0 0.0
    %1098 = vmatprep.subr.mxu0 0.0
    %1099 = vmatpush1.msra.mxu0 0.0
    %1100 = vmatprep.subr.mxu0 0.0
    %1101 = vmatpush1.msra.mxu0 0.0
    %1102 = vmatprep.subr.mxu0 0.0
    %1103 = vmatpush1.msra.mxu0 0.0
    %1104 = vmatprep.subr.mxu0 0.0
    %1105 = vmatpush1.msra.mxu0 0.0
    %1106 = vmatprep.subr.mxu0 0.0
    %1107 = vmatpush1.msra.mxu0 0.0
    %1108 = vmatprep.subr.mxu0 0.0
    %1109 = vmatpush1.msra.mxu0 0.0
    %1110 = vmatprep.subr.mxu0 0.0
    %1111 = vmatpush1.msra.mxu0 0.0
    %1112 = vmatprep.subr.mxu0 0.0
    %1113 = vmatpush1.msra.mxu0 0.0
    %1114 = vmatprep.subr.mxu0 0.0
    %1115 = vmatpush1.msra.mxu0 0.0
    %1116 = vmatprep.subr.mxu0 0.0
    %1117 = vmatpush1.msra.mxu0 0.0
    %1118 = vmatprep.subr.mxu0 0.0
    %1119 = vmatpush1.msra.mxu0 0.0
    %1120 = vmatprep.subr.mxu0 0.0
    %1121 = vmatpush1.msra.mxu0 0.0
    %1122 = vmatprep.subr.mxu0 0.0
    %1123 = vmatpush1.msra.mxu0 0.0
    %1124 = vmatprep.subr.mxu0 0.0
    %1125 = vmatpush1.msra.mxu0 0.0
    %1126 = vmatprep.subr.mxu0 0.0
    %1127 = vmatpush1.msra.mxu0 0.0
    %1128 = vmatprep.subr.mxu0 0.0
    %1129 = vmatpush1.msra.mxu0 0.0
    %1130 = vmatprep.subr.mxu0 0.0
    %1131 = vmatpush1.msra.mxu0 0.0
    %1132 = vmatprep.subr.mxu0 0.0
    %1133 = vmatpush1.msra.mxu0 0.0
    %1134 = vmatprep.mubr.f32.mxu0 0.0
    %1135 = vmatmul.mubr.f32.gmra.mrb[0].mxu0 %v727
    %v1136 = vpop.f32.mrb[0].mxu0
    %v1137 = vadd.f32 0.0, %v1136
    %v1138 = vpop.f32.mrb[0].mxu0
    %1139 = vmatprep.mubr.f32.mxu0 0.0
    %1140 = vmatmul.mubr.f32.gmra.mrb[0].mxu0 %v730
    %v1141 = vpop.f32.mrb[0].mxu0
    %v1142 = vadd.f32 0.0, %v1141
    %v1143 = vpop.f32.mrb[0].mxu0
    %1144 = vmatprep.mubr.f32.mxu0 0.0
    %1145 = vmatmul.mubr.f32.gmra.mrb[0].mxu0 %v733
    %v1146 = vpop.f32.mrb[0].mxu0
    %v1147 = vadd.f32 0.0, %v1146
    %v1148 = vpop.f32.mrb[0].mxu0
    %1149 = vmatprep.mubr.f32.mxu0 0.0
    %1150 = vmatmul.mubr.f32.gmra.mrb[0].mxu0 %v736
    %v1151 = vpop.f32.mrb[0].mxu0
    %v1152 = vadd.f32 0.0, %v1151
    %v1153 = vpop.f32.mrb[0].mxu0
    %1154 = vdwg.mxu0
    %v1156 = vsel %vm278, %v722, 0
    %v1159 = vsel %vm278, %v723, 0
    %1161 = vmatprep.subr.mxu0 0.0
    %1162 = vmatpush1.msra.mxu0 %v1137
    %1163 = vmatprep.subr.mxu0 0.0
    %1164 = vmatpush1.msra.mxu0 %v1142
    %1165 = vmatprep.subr.mxu0 0.0
    %1166 = vmatpush1.msra.mxu0 %v1147
    %1167 = vmatprep.subr.mxu0 0.0
    %1168 = vmatpush1.msra.mxu0 %v1152
    %1169 = vmatprep.subr.mxu0 0.0
    %1170 = vmatpush1.msra.mxu0 0.0
    %1171 = vmatprep.subr.mxu0 0.0
    %1172 = vmatpush1.msra.mxu0 0.0
    %1173 = vmatprep.subr.mxu0 0.0
    %1174 = vmatpush1.msra.mxu0 0.0
    %1175 = vmatprep.subr.mxu0 0.0
    %1176 = vmatpush1.msra.mxu0 0.0
    %1177 = vmatprep.subr.mxu0 0.0
    %1178 = vmatpush1.msra.mxu0 0.0
    %1179 = vmatprep.subr.mxu0 0.0
    %1180 = vmatpush1.msra.mxu0 0.0
    %1181 = vmatprep.subr.mxu0 0.0
    %1182 = vmatpush1.msra.mxu0 0.0
    %1183 = vmatprep.subr.mxu0 0.0
    %1184 = vmatpush1.msra.mxu0 0.0
    %1185 = vmatprep.subr.mxu0 0.0
    %1186 = vmatpush1.msra.mxu0 0.0
    %1187 = vmatprep.subr.mxu0 0.0
    %1188 = vmatpush1.msra.mxu0 0.0
    %1189 = vmatprep.subr.mxu0 0.0
    %1190 = vmatpush1.msra.mxu0 0.0
    %1191 = vmatprep.subr.mxu0 0.0
    %1192 = vmatpush1.msra.mxu0 0.0
    %1193 = vmatprep.subr.mxu0 0.0
    %1194 = vmatpush1.msra.mxu0 0.0
    %1195 = vmatprep.subr.mxu0 0.0
    %1196 = vmatpush1.msra.mxu0 0.0
    %1197 = vmatprep.subr.mxu0 0.0
    %1198 = vmatpush1.msra.mxu0 0.0
    %1199 = vmatprep.subr.mxu0 0.0
    %1200 = vmatpush1.msra.mxu0 0.0
    %1201 = vmatprep.subr.mxu0 0.0
    %1202 = vmatpush1.msra.mxu0 0.0
    %1203 = vmatprep.subr.mxu0 0.0
    %1204 = vmatpush1.msra.mxu0 0.0
    %1205 = vmatprep.subr.mxu0 0.0
    %1206 = vmatpush1.msra.mxu0 0.0
    %1207 = vmatprep.subr.mxu0 0.0
    %1208 = vmatpush1.msra.mxu0 0.0
    %1209 = vmatprep.subr.mxu0 0.0
    %1210 = vmatpush1.msra.mxu0 0.0
    %1211 = vmatprep.subr.mxu0 0.0
    %1212 = vmatpush1.msra.mxu0 0.0
    %1213 = vmatprep.subr.mxu0 0.0
    %1214 = vmatpush1.msra.mxu0 0.0
    %1215 = vmatprep.subr.mxu0 0.0
    %1216 = vmatpush1.msra.mxu0 0.0
    %1217 = vmatprep.subr.mxu0 0.0
    %1218 = vmatpush1.msra.mxu0 0.0
    %1219 = vmatprep.subr.mxu0 0.0
    %1220 = vmatpush1.msra.mxu0 0.0
    %1221 = vmatprep.subr.mxu0 0.0
    %1222 = vmatpush1.msra.mxu0 0.0
    %1223 = vmatprep.subr.mxu0 0.0
    %1224 = vmatpush1.msra.mxu0 0.0
    %1225 = vmatprep.mubr.f32.mxu0 0.0
    %1226 = vmatmul.mubr.f32.gmra.mrb[0].mxu0 %v1156
    %v1227 = vpop.f32.mrb[0].mxu0
    %v1228 = vadd.f32 0.0, %v1227
    %v1229 = vpop.f32.mrb[0].mxu0
    %1230 = vmatprep.mubr.f32.mxu0 0.0
    %1231 = vmatmul.mubr.f32.gmra.mrb[0].mxu0 %v1159
    %v1232 = vpop.f32.mrb[0].mxu0
    %v1233 = vadd.f32 0.0, %v1232
    %v1234 = vpop.f32.mrb[0].mxu0
    %1235 = vdwg.mxu0
    %v1236 = vadd.f32 %v1062, %v1228
    %v1237 = vadd.f32 %v1067, %v1233
    %v1238 = vadd.f32 %v1236, %v1237
    %v1239 = vrot.slane %v1238, 4
    %v1240 = vadd.f32 %v1238, %v1239
    %v1241 = vrot.slane %v1240, 2
    %v1242 = vadd.f32 %v1240, %v1241
    %v1243 = vrot.slane %v1242, 1
    %v1244 = vadd.f32 %v1242, %v1243
    %v1245 = vmul.f32 %v1244, 0.0625
    %v1246 = vmul.f32 %v1236, %v1236
    %v1247 = vmul.f32 %v1237, %v1237
    %v1248 = vadd.f32 %v1246, %v1247
    %v1249 = vrot.slane %v1248, 4
    %v1250 = vadd.f32 %v1248, %v1249
    %v1251 = vrot.slane %v1250, 2
    %v1252 = vadd.f32 %v1250, %v1251
    %v1253 = vrot.slane %v1252, 1
    %v1254 = vadd.f32 %v1252, %v1253
    %v1255 = vmul.f32 %v1254, 0.0625
    %v1256 = vmul.f32 %v1245, %v1245
    %v1257 = vsub.f32 %v1255, %v1256
    %v1258 = vmax.f32 %v1257, 0.0
    %v1259 = vadd.f32 %v1258, 1e-05
    %v1260 = vrsqrt.pop %v1259
    %v1261 = vmul.f32 %v724, %v1260
    %v1262 = vmul.f32 %v1245, %v1261
    %v1263 = vsub.f32 %v725, %v1262
    %v1265 = vlaneseq
    %v1266 = vshrl.u32 %v1265, 7
    %v1267 = vsub.s32 0, %v1266
    %v1268 = vrot.slane %v1261, %v1267
    %v1270 = vmul.f32 %v1236, %v1268
    %v1271 = vmul.f32 %v1237, %v1268
    %v1273 = vlaneseq
    %v1274 = vshrl.u32 %v1273, 7
    %v1275 = vsub.s32 0, %v1274
    %v1276 = vrot.slane %v1263, %v1275
    %v1278 = vadd.f32 %v1270, %v1276
    %v1279 = vadd.f32 %v1271, %v1276
    %v1280 = vmax.f32 %v1278, 0.0
    %v1281 = vmax.f32 %v1279, 0.0
    %1282 = vst [vmem:[#allocation8] sm:$0xff] %v1280
    %1283 = vst [vmem:[#allocation8 + $0x8] sm:$0xff] %v1281
    // Predicated region
    $region50: #{tpu_custom_call.1} parent=1 // pred_check
      _
    $region51: #{tpu_custom_call.1} parent=1 // pred_check_branch
      %1285 = sbr.rel (0) target = $region53
    $region52: #{tpu_custom_call.1} parent=1 // pred_region
      %s1287 = ssub.s32 256, 256
      %1288 = vsyncadd [#allocation4], %s1287
      %s1289 = sshll.u32 [#allocation8], 4
      %s1290 = int_to_ptr.vmem [resolvable:$true] %s1289
      %1295 = dma.vmem_to_hbm [thread:$0]  %s1290, 256, %s9, [#allocation4], 128, 128, 8
    $region53: #{tpu_custom_call.1} parent=1 // pred_fallthru
      _
    // Predicated region
    $region54: #{tpu_custom_call.1} parent=1 // pred_check
      _
    $region55: #{tpu_custom_call.1} parent=1 // pred_check_branch
      %1297 = sbr.rel (0) target = $region57
    $region56: #{tpu_custom_call.1} parent=1 // pred_region
      %1298 = dma.done [#allocation4], 256
    $region57: #{tpu_custom_call.1} parent=1 // pred_fallthru
      _
    %1299 = vsyncpa [#allocation3], 1
    %1300 = vsyncpa [#allocation6], 1
    %1301 = vsyncpa [#allocation4], 1

</llo_original>
